<compile_context>
chip_gen: v5e
topology: v5e:2x2
jax: 0.10.0
libtpu: 0.0.40
codegen_flags: <defaults>
</compile_context>

<pallas_src>
import jax
import jax.numpy as jnp
from jax import lax
from jax.experimental import pallas as pl
from jax.experimental.pallas import tpu as pltpu

K = 20              # word_embed
HEADS = 8
DEPTH = 7
FF = 4 * K
HK = HEADS * K
EPS = 1e-5          # nn.LayerNorm default
MXU_DTYPE = jnp.bfloat16   # MXU operand dtype; accumulation + VPU/EUP stay f32

VOCAB = 50
MAX_SEQ = 32


def _layer_norm(x, w, b):
    mu = jnp.mean(x, axis=-1, keepdims=True)
    var = jnp.mean((x - mu) ** 2, axis=-1, keepdims=True)   # biased, like torch
    return (x - mu) * lax.rsqrt(var + EPS) * w + b


def _mm(a, b):
    """Standard matmul; bf16 MXU operands, f32 accumulation."""
    return jnp.dot(a.astype(MXU_DTYPE), b.astype(MXU_DTYPE),
                   preferred_element_type=jnp.float32)


def _mm_nt(a, b):
    """a @ b.T (contract the last dim of both operands) on the MXU."""
    return lax.dot_general(a.astype(MXU_DTYPE), b.astype(MXU_DTYPE),
                           (((1,), (1,)), ((), ())),
                           preferred_element_type=jnp.float32)


def c_transformer_kernel(x_ref,
                         qw_ref, qb_ref, kw_ref, kb_ref, vw_ref, vb_ref,
                         fcw_ref, fcb_ref, ln1w_ref, ln1b_ref,
                         ff1w_ref, ff1b_ref, ff2w_ref, ff2b_ref,
                         ln2w_ref, ln2b_ref, hw_ref, hb_ref,
                         o_ref):
    T = x_ref.shape[1]
    H, Kd = HEADS, K

    # Per-head block-selector mask, generated in-kernel from iota (no dense
    # constant DMA'd from HBM):  hm[h, j] = 1.0  iff lane j belongs to head h.
    lane = lax.broadcasted_iota(jnp.int32, (H, H * Kd), 1)
    hrow = lax.broadcasted_iota(jnp.int32, (H, H * Kd), 0)
    lo = hrow * Kd
    hm = jnp.logical_and(lane >= lo, lane < lo + Kd).astype(jnp.float32)

    def block(d, x):                                   # x: (T, K) f32
        # --- projections; k**-0.25 folded into q/k weights+biases at pack time
        q = _mm(x, qw_ref[d]) + qb_ref[d]              # (T, H*K)
        k = _mm(x, kw_ref[d]) + kb_ref[d]              # (T, H*K)
        v = _mm(x, vw_ref[d]) + vb_ref[d]              # (T, H*K)

        # --- per-head dot products, lane-dense along the softmax (query) axis:
        # rows r = (key position m, head h), lanes = query position n.
        a = (k[:, None, :] * hm[None, :, :]).reshape(T * H, H * Kd)
        scores = _mm_nt(a, q)                          # (T*H, T)

        # softmax over the query axis (reference: torch.softmax(dot, dim=2));
        # keepdims lane reductions, reciprocal taken on the row sums.
        mx = jnp.max(scores, axis=-1, keepdims=True)
        p = jnp.exp(scores - mx)
        denom = jnp.sum(p, axis=-1, keepdims=True)     # (T*H, 1)
        attn = p * pl.reciprocal(denom, approx=True)

        # out[m, (h,d)] = sum_n attn[(m,h),n] * v[n,(h,d)]  -> head-major concat
        ctx = _mm(attn, v)                             # (T*H, H*K)
        out = jnp.sum(ctx.reshape(T, H, H * Kd) * hm[None, :, :], axis=1)

        # --- fc on the head concat, then the two LayerNorm/FFN residuals -----
        attended = _mm(out, fcw_ref[d]) + fcb_ref[d]   # (T, K)
        x1 = _layer_norm(attended + x, ln1w_ref[d], ln1b_ref[d])
        h1 = jnp.maximum(_mm(x1, ff1w_ref[d]) + ff1b_ref[d], 0.0)   # ReLU
        ff = _mm(h1, ff2w_ref[d]) + ff2b_ref[d]
        return _layer_norm(ff + x1, ln2w_ref[d], ln2b_ref[d])

    x = lax.fori_loop(0, DEPTH, block, x_ref[0])       # (T, K) carried value

    # --- classification head on the VPU: fc -> mean over seq -> sigmoid ------
    logits = jnp.sum(x * hw_ref[...], axis=-1, keepdims=True) + hb_ref[...]  # (T,1)
    mean = jnp.sum(logits, axis=0, keepdims=True) * (1.0 / T)                # (1,1)
    o_ref[...] = (1.0 / (1.0 + jnp.exp(-mean))).reshape(1, 1, 1)


# --------------------------- parameter handling ------------------------------

_WEIGHT_NAMES = ("qw", "qb", "kw", "kb", "vw", "vb", "fcw", "fcb",
                 "ln1w", "ln1b", "ff1w", "ff1b", "ff2w", "ff2b",
                 "ln2w", "ln2b", "head_w", "head_b")


def init_params(key):
    keys = iter(jax.random.split(key, 128))

    def lin(in_f, out_f):                    # torch-style Linear init
        lim = 1.0 / (in_f ** 0.5)
        w = jax.random.uniform(next(keys), (in_f, out_f), jnp.float32, -lim, lim)
        b = jax.random.uniform(next(keys), (1, out_f), jnp.float32, -lim, lim)
        return w, b

    blocks = []
    for _ in range(DEPTH):
        blk = {}
        blk["qw"], blk["qb"] = lin(K, HK)
        blk["kw"], blk["kb"] = lin(K, HK)
        blk["vw"], blk["vb"] = lin(K, HK)
        blk["fcw"], blk["fcb"] = lin(HK, K)
        blk["ln1w"], blk["ln1b"] = (jnp.ones((1, K), jnp.float32),
                                    jnp.zeros((1, K), jnp.float32))
        blk["ff1w"], blk["ff1b"] = lin(K, FF)
        blk["ff2w"], blk["ff2b"] = lin(FF, K)
        blk["ln2w"], blk["ln2b"] = (jnp.ones((1, K), jnp.float32),
                                    jnp.zeros((1, K), jnp.float32))
        blocks.append(blk)

    head_w, head_b = lin(K, 1)
    word_table = jax.random.normal(next(keys), (VOCAB + 1, K), jnp.float32)
    pos_table = jax.random.normal(next(keys), (MAX_SEQ + 1, K), jnp.float32)
    return blocks, (head_w, head_b), word_table, pos_table


def pack_params(blocks, head):
    """Stack per-block params along depth, fold k**-0.25 into q/k, store
    matmul weights in bf16 (MXU operands); biases/LN/head stay f32."""
    scale = K ** -0.25
    stack = lambda name: jnp.stack([b[name] for b in blocks])

    packed = {
        "qw":   (stack("qw") * scale).astype(MXU_DTYPE),
        "qb":   stack("qb") * scale,
        "kw":   (stack("kw") * scale).astype(MXU_DTYPE),
        "kb":   stack("kb") * scale,
        "vw":   stack("vw").astype(MXU_DTYPE),
        "vb":   stack("vb"),
        "fcw":  stack("fcw").astype(MXU_DTYPE),
        "fcb":  stack("fcb"),
        "ln1w": stack("ln1w"), "ln1b": stack("ln1b"),
        "ff1w": stack("ff1w").astype(MXU_DTYPE),
        "ff1b": stack("ff1b"),
        "ff2w": stack("ff2w").astype(MXU_DTYPE),
        "ff2b": stack("ff2b"),
        "ln2w": stack("ln2w"), "ln2b": stack("ln2b"),
    }
    head_w, head_b = head
    packed["head_w"] = head_w.reshape(1, K)      # VPU lane-dot layout
    packed["head_b"] = head_b.reshape(1, 1)
    return packed


def _replicated_spec(arr):
    """Full-array block re-used (not re-fetched) across all grid steps."""
    zeros = (0,) * arr.ndim
    return pl.BlockSpec(arr.shape, lambda i: zeros)


# ------------------------------ forward pass ---------------------------------

def c_transformer_forward(token_ids, packed, word_table, pos_table):
    # TODO(synk): string tokenization (remove_stops / word2tensor / vocab) and
    # nn.EmbeddingBag pooling are host-side python; modeled as a per-token
    # embedding lookup producing the same (b, t, k) word tensor.
    B, T = token_ids.shape
    w = word_table[token_ids]                           # (B, T, K)
    pos = pos_table[:T][None, :, :]                     # (1, T, K) -> broadcast
    x = (pos + w).astype(jnp.float32)

    weights = tuple(packed[n] for n in _WEIGHT_NAMES)
    args = (x,) + weights

    in_specs = ([pl.BlockSpec((1, T, K), lambda i: (i, 0, 0))]
                + [_replicated_spec(a) for a in weights])

    per_layer = (3 * 2 * T * K * HK                 # q, k, v projections
                 + 2 * (T * HEADS) * HK * T         # scores
                 + 2 * (T * HEADS) * T * HK         # attn @ v
                 + 2 * T * HK * K                   # fc
                 + 2 * T * K * FF + 2 * T * FF * K)  # ff1, ff2
    flops = B * (DEPTH * per_layer + 2 * T * K + T)
    transcend = B * (DEPTH * (T * HEADS * T + T * HEADS + 2 * T) + 1)
    bytes_acc = sum(int(a.size) * a.dtype.itemsize for a in args) + B * 4

    out = pl.pallas_call(
        c_transformer_kernel,
        grid=(B,),
        out_shape=jax.ShapeDtypeStruct((B, 1, 1), jnp.float32),
        in_specs=in_specs,
        out_specs=pl.BlockSpec((1, 1, 1), lambda i: (i, 0, 0)),
        compiler_params=pltpu.CompilerParams(
            dimension_semantics=("parallel",),      # v7x: 2 TCs share the batch
            vmem_limit_bytes=32 * 1024 * 1024,
        ),
        cost_estimate=pl.CostEstimate(
            flops=flops, transcendentals=transcend, bytes_accessed=bytes_acc),
    )(*args)
    return out.reshape(-1)                              # sigmoid(classes), (B,)


if __name__ == "__main__":
    key = jax.random.PRNGKey(0)
    k_params, k_tok = jax.random.split(key)

    blocks, head, word_table, pos_table = init_params(k_params)
    packed = pack_params(blocks, head)

    B, T = 2, 8
    token_ids = jax.random.randint(k_tok, (B, T), 0, VOCAB)

    out = c_transformer_forward(token_ids, packed, word_table, pos_table)
    out = jax.block_until_ready(out)
    assert out.shape == (B,)
    assert bool(jnp.all(jnp.isfinite(out)))
    assert bool(jnp.all((out > 0.0) & (out < 1.0)))
    print("KERNEL_OK")
</pallas_src>

<mosaic_0001>
module attributes {stable_mosaic.version = 11 : i64} {
  func.func @c_transformer_kernel(%arg0: i32, %arg1: memref<1x8x20xf32, #tpu.memory_space<vmem>>, %arg2: memref<7x20x160xbf16, #tpu.memory_space<vmem>>, %arg3: memref<7x1x160xf32, #tpu.memory_space<vmem>>, %arg4: memref<7x20x160xbf16, #tpu.memory_space<vmem>>, %arg5: memref<7x1x160xf32, #tpu.memory_space<vmem>>, %arg6: memref<7x20x160xbf16, #tpu.memory_space<vmem>>, %arg7: memref<7x1x160xf32, #tpu.memory_space<vmem>>, %arg8: memref<7x160x20xbf16, #tpu.memory_space<vmem>>, %arg9: memref<7x1x20xf32, #tpu.memory_space<vmem>>, %arg10: memref<7x1x20xf32, #tpu.memory_space<vmem>>, %arg11: memref<7x1x20xf32, #tpu.memory_space<vmem>>, %arg12: memref<7x20x80xbf16, #tpu.memory_space<vmem>>, %arg13: memref<7x1x80xf32, #tpu.memory_space<vmem>>, %arg14: memref<7x80x20xbf16, #tpu.memory_space<vmem>>, %arg15: memref<7x1x20xf32, #tpu.memory_space<vmem>>, %arg16: memref<7x1x20xf32, #tpu.memory_space<vmem>>, %arg17: memref<7x1x20xf32, #tpu.memory_space<vmem>>, %arg18: memref<1x20xf32, #tpu.memory_space<vmem>>, %arg19: memref<1x1xf32, #tpu.memory_space<vmem>>, %arg20: memref<1x1x1xf32, #tpu.memory_space<vmem>>) attributes {dimension_semantics = [#tpu.dimension_semantics<parallel>], iteration_bounds = array<i64: 2>, scalar_prefetch = 0 : i64, scratch_operands = 0 : i64, tpu.core_type = #tpu.core_type<tc>, window_params = [{transform_indices = @transform_0, window_bounds = array<i64: 1, 8, 20>}, {pipeline_mode = #tpu.pipeline_mode<synchronous>, transform_indices = @transform_1, window_bounds = array<i64: 7, 20, 160>}, {pipeline_mode = #tpu.pipeline_mode<synchronous>, transform_indices = @transform_2, window_bounds = array<i64: 7, 1, 160>}, {pipeline_mode = #tpu.pipeline_mode<synchronous>, transform_indices = @transform_3, window_bounds = array<i64: 7, 20, 160>}, {pipeline_mode = #tpu.pipeline_mode<synchronous>, transform_indices = @transform_4, window_bounds = array<i64: 7, 1, 160>}, {pipeline_mode = #tpu.pipeline_mode<synchronous>, transform_indices = @transform_5, window_bounds = array<i64: 7, 20, 160>}, {pipeline_mode = #tpu.pipeline_mode<synchronous>, transform_indices = @transform_6, window_bounds = array<i64: 7, 1, 160>}, {pipeline_mode = #tpu.pipeline_mode<synchronous>, transform_indices = @transform_7, window_bounds = array<i64: 7, 160, 20>}, {pipeline_mode = #tpu.pipeline_mode<synchronous>, transform_indices = @transform_8, window_bounds = array<i64: 7, 1, 20>}, {pipeline_mode = #tpu.pipeline_mode<synchronous>, transform_indices = @transform_9, window_bounds = array<i64: 7, 1, 20>}, {pipeline_mode = #tpu.pipeline_mode<synchronous>, transform_indices = @transform_10, window_bounds = array<i64: 7, 1, 20>}, {pipeline_mode = #tpu.pipeline_mode<synchronous>, transform_indices = @transform_11, window_bounds = array<i64: 7, 20, 80>}, {pipeline_mode = #tpu.pipeline_mode<synchronous>, transform_indices = @transform_12, window_bounds = array<i64: 7, 1, 80>}, {pipeline_mode = #tpu.pipeline_mode<synchronous>, transform_indices = @transform_13, window_bounds = array<i64: 7, 80, 20>}, {pipeline_mode = #tpu.pipeline_mode<synchronous>, transform_indices = @transform_14, window_bounds = array<i64: 7, 1, 20>}, {pipeline_mode = #tpu.pipeline_mode<synchronous>, transform_indices = @transform_15, window_bounds = array<i64: 7, 1, 20>}, {pipeline_mode = #tpu.pipeline_mode<synchronous>, transform_indices = @transform_16, window_bounds = array<i64: 7, 1, 20>}, {pipeline_mode = #tpu.pipeline_mode<synchronous>, transform_indices = @transform_17, window_bounds = array<i64: 1, 20>}, {pipeline_mode = #tpu.pipeline_mode<synchronous>, transform_indices = @transform_18, window_bounds = array<i64: 1, 1>}, {transform_indices = @transform_19, window_bounds = array<i64: 1, 1, 1>}]} {
    %0 = tpu.iota {dimensions = array<i32: 1>} : vector<8x160xi32>
    %1 = tpu.iota {dimensions = array<i32: 0>} : vector<8x160xi32>
    %c20_i32 = arith.constant 20 : i32
    %2 = vector.broadcast %c20_i32 : i32 to vector<8x160xi32>
    %3 = arith.muli %1, %2 : vector<8x160xi32>
    %4 = arith.cmpi sge, %0, %3 : vector<8x160xi32>
    %c20_i32_0 = arith.constant 20 : i32
    %5 = vector.broadcast %c20_i32_0 : i32 to vector<8x160xi32>
    %6 = arith.addi %3, %5 : vector<8x160xi32>
    %7 = arith.cmpi slt, %0, %6 : vector<8x160xi32>
    %8 = arith.andi %4, %7 : vector<8x160xi1>
    %9 = arith.extui %8 : vector<8x160xi1> to vector<8x160xi32>
    %10 = arith.sitofp %9 : vector<8x160xi32> to vector<8x160xf32>
    %c0 = arith.constant 0 : index
    %c0_1 = arith.constant 0 : index
    %c0_2 = arith.constant 0 : index
    %11 = vector.load %arg1[%c0, %c0_1, %c0_2] : memref<1x8x20xf32, #tpu.memory_space<vmem>>, vector<1x8x20xf32>
    %12 = vector.shape_cast %11 : vector<1x8x20xf32> to vector<8x20xf32>
    %c0_i32 = arith.constant 0 : i32
    %c7_i32 = arith.constant 7 : i32
    %13 = arith.addi %c0_i32, %c7_i32 : i32
    %c1_i32 = arith.constant 1 : i32
    %14 = scf.for %arg21 = %c0_i32 to %13 step %c1_i32 iter_args(%arg22 = %12) -> (vector<8x20xf32>)  : i32 {
      %36 = arith.index_cast %arg21 : i32 to index
      %c0_16 = arith.constant 0 : index
      %c0_17 = arith.constant 0 : index
      %37 = vector.load %arg2[%36, %c0_16, %c0_17] : memref<7x20x160xbf16, #tpu.memory_space<vmem>>, vector<1x20x160xbf16>
      %38 = vector.shape_cast %37 : vector<1x20x160xbf16> to vector<20x160xbf16>
      %39 = arith.truncf %arg22 : vector<8x20xf32> to vector<8x20xbf16>
      %cst_18 = arith.constant dense<0.000000e+00> : vector<8x160xf32>
      %40 = tpu.matmul %39, %38, %cst_18 {dimension_numbers = #tpu.dot_dimension_numbers<[1], [0], [0], [1], [0, 0, 1, 1], [], []>} : vector<8x20xbf16>, vector<20x160xbf16>, vector<8x160xf32> -> vector<8x160xf32>
      %41 = arith.index_cast %arg21 : i32 to index
      %c0_19 = arith.constant 0 : index
      %c0_20 = arith.constant 0 : index
      %42 = vector.load %arg3[%41, %c0_19, %c0_20] : memref<7x1x160xf32, #tpu.memory_space<vmem>>, vector<1x1x160xf32>
      %43 = vector.shape_cast %42 : vector<1x1x160xf32> to vector<1x160xf32>
      %44 = vector.broadcast %43 : vector<1x160xf32> to vector<8x160xf32>
      %45 = arith.addf %40, %44 : vector<8x160xf32>
      %46 = arith.index_cast %arg21 : i32 to index
      %c0_21 = arith.constant 0 : index
      %c0_22 = arith.constant 0 : index
      %47 = vector.load %arg4[%46, %c0_21, %c0_22] : memref<7x20x160xbf16, #tpu.memory_space<vmem>>, vector<1x20x160xbf16>
      %48 = vector.shape_cast %47 : vector<1x20x160xbf16> to vector<20x160xbf16>
      %49 = arith.truncf %arg22 : vector<8x20xf32> to vector<8x20xbf16>
      %cst_23 = arith.constant dense<0.000000e+00> : vector<8x160xf32>
      %50 = tpu.matmul %49, %48, %cst_23 {dimension_numbers = #tpu.dot_dimension_numbers<[1], [0], [0], [1], [0, 0, 1, 1], [], []>} : vector<8x20xbf16>, vector<20x160xbf16>, vector<8x160xf32> -> vector<8x160xf32>
      %51 = arith.index_cast %arg21 : i32 to index
      %c0_24 = arith.constant 0 : index
      %c0_25 = arith.constant 0 : index
      %52 = vector.load %arg5[%51, %c0_24, %c0_25] : memref<7x1x160xf32, #tpu.memory_space<vmem>>, vector<1x1x160xf32>
      %53 = vector.shape_cast %52 : vector<1x1x160xf32> to vector<1x160xf32>
      %54 = vector.broadcast %53 : vector<1x160xf32> to vector<8x160xf32>
      %55 = arith.addf %50, %54 : vector<8x160xf32>
      %56 = arith.index_cast %arg21 : i32 to index
      %c0_26 = arith.constant 0 : index
      %c0_27 = arith.constant 0 : index
      %57 = vector.load %arg6[%56, %c0_26, %c0_27] : memref<7x20x160xbf16, #tpu.memory_space<vmem>>, vector<1x20x160xbf16>
      %58 = vector.shape_cast %57 : vector<1x20x160xbf16> to vector<20x160xbf16>
      %59 = arith.truncf %arg22 : vector<8x20xf32> to vector<8x20xbf16>
      %cst_28 = arith.constant dense<0.000000e+00> : vector<8x160xf32>
      %60 = tpu.matmul %59, %58, %cst_28 {dimension_numbers = #tpu.dot_dimension_numbers<[1], [0], [0], [1], [0, 0, 1, 1], [], []>} : vector<8x20xbf16>, vector<20x160xbf16>, vector<8x160xf32> -> vector<8x160xf32>
      %61 = arith.index_cast %arg21 : i32 to index
      %c0_29 = arith.constant 0 : index
      %c0_30 = arith.constant 0 : index
      %62 = vector.load %arg7[%61, %c0_29, %c0_30] : memref<7x1x160xf32, #tpu.memory_space<vmem>>, vector<1x1x160xf32>
      %63 = vector.shape_cast %62 : vector<1x1x160xf32> to vector<1x160xf32>
      %64 = vector.broadcast %63 : vector<1x160xf32> to vector<8x160xf32>
      %65 = arith.addf %60, %64 : vector<8x160xf32>
      %66 = vector.shape_cast %55 : vector<8x160xf32> to vector<8x1x160xf32>
      %67 = vector.shape_cast %10 : vector<8x160xf32> to vector<1x8x160xf32>
      %68 = vector.broadcast %66 : vector<8x1x160xf32> to vector<8x8x160xf32>
      %69 = vector.broadcast %67 : vector<1x8x160xf32> to vector<8x8x160xf32>
      %70 = arith.mulf %68, %69 : vector<8x8x160xf32>
      %71 = vector.shape_cast %70 : vector<8x8x160xf32> to vector<64x160xf32>
      %72 = arith.truncf %71 : vector<64x160xf32> to vector<64x160xbf16>
      %73 = arith.truncf %45 : vector<8x160xf32> to vector<8x160xbf16>
      %cst_31 = arith.constant dense<0.000000e+00> : vector<64x8xf32>
      %74 = tpu.matmul %72, %73, %cst_31 {dimension_numbers = #tpu.dot_dimension_numbers<[1], [1], [0], [0], [0, 0, 1, 0], [], []>} : vector<64x160xbf16>, vector<8x160xbf16>, vector<64x8xf32> -> vector<64x8xf32>
      %cst_32 = arith.constant dense<0xFF800000> : vector<64xf32>
      %75 = vector.multi_reduction <maximumf>, %74, %cst_32 [1] : vector<64x8xf32> to vector<64xf32>
      %76 = vector.shape_cast %75 : vector<64xf32> to vector<64x1xf32>
      %77 = vector.broadcast %76 : vector<64x1xf32> to vector<64x8xf32>
      %78 = arith.subf %74, %77 : vector<64x8xf32>
      %79 = math.exp %78 : vector<64x8xf32>
      %cst_33 = arith.constant dense<0.000000e+00> : vector<64xf32>
      %80 = vector.multi_reduction <add>, %79, %cst_33 [1] : vector<64x8xf32> to vector<64xf32>
      %81 = vector.shape_cast %80 : vector<64xf32> to vector<64x1xf32>
      %82 = tpu.reciprocal %81 {approx = true} : vector<64x1xf32> -> vector<64x1xf32>
      %83 = vector.broadcast %82 : vector<64x1xf32> to vector<64x8xf32>
      %84 = arith.mulf %79, %83 : vector<64x8xf32>
      %85 = arith.truncf %84 : vector<64x8xf32> to vector<64x8xbf16>
      %86 = arith.truncf %65 : vector<8x160xf32> to vector<8x160xbf16>
      %cst_34 = arith.constant dense<0.000000e+00> : vector<64x160xf32>
      %87 = tpu.matmul %85, %86, %cst_34 {dimension_numbers = #tpu.dot_dimension_numbers<[1], [0], [0], [1], [0, 0, 1, 1], [], []>} : vector<64x8xbf16>, vector<8x160xbf16>, vector<64x160xf32> -> vector<64x160xf32>
      %88 = vector.shape_cast %87 : vector<64x160xf32> to vector<8x8x160xf32>
      %89 = vector.shape_cast %10 : vector<8x160xf32> to vector<1x8x160xf32>
      %90 = vector.broadcast %89 : vector<1x8x160xf32> to vector<8x8x160xf32>
      %91 = arith.mulf %88, %90 : vector<8x8x160xf32>
      %cst_35 = arith.constant dense<0.000000e+00> : vector<8x160xf32>
      %92 = vector.multi_reduction <add>, %91, %cst_35 [1] : vector<8x8x160xf32> to vector<8x160xf32>
      %93 = arith.index_cast %arg21 : i32 to index
      %c0_36 = arith.constant 0 : index
      %c0_37 = arith.constant 0 : index
      %94 = vector.load %arg8[%93, %c0_36, %c0_37] : memref<7x160x20xbf16, #tpu.memory_space<vmem>>, vector<1x160x20xbf16>
      %95 = vector.shape_cast %94 : vector<1x160x20xbf16> to vector<160x20xbf16>
      %96 = arith.truncf %92 : vector<8x160xf32> to vector<8x160xbf16>
      %cst_38 = arith.constant dense<0.000000e+00> : vector<8x20xf32>
      %97 = tpu.matmul %96, %95, %cst_38 {dimension_numbers = #tpu.dot_dimension_numbers<[1], [0], [0], [1], [0, 0, 1, 1], [], []>} : vector<8x160xbf16>, vector<160x20xbf16>, vector<8x20xf32> -> vector<8x20xf32>
      %98 = arith.index_cast %arg21 : i32 to index
      %c0_39 = arith.constant 0 : index
      %c0_40 = arith.constant 0 : index
      %99 = vector.load %arg9[%98, %c0_39, %c0_40] : memref<7x1x20xf32, #tpu.memory_space<vmem>>, vector<1x1x20xf32>
      %100 = vector.shape_cast %99 : vector<1x1x20xf32> to vector<1x20xf32>
      %101 = vector.broadcast %100 : vector<1x20xf32> to vector<8x20xf32>
      %102 = arith.addf %97, %101 : vector<8x20xf32>
      %103 = arith.addf %102, %arg22 : vector<8x20xf32>
      %104 = arith.index_cast %arg21 : i32 to index
      %c0_41 = arith.constant 0 : index
      %c0_42 = arith.constant 0 : index
      %105 = vector.load %arg10[%104, %c0_41, %c0_42] : memref<7x1x20xf32, #tpu.memory_space<vmem>>, vector<1x1x20xf32>
      %106 = vector.shape_cast %105 : vector<1x1x20xf32> to vector<1x20xf32>
      %107 = arith.index_cast %arg21 : i32 to index
      %c0_43 = arith.constant 0 : index
      %c0_44 = arith.constant 0 : index
      %108 = vector.load %arg11[%107, %c0_43, %c0_44] : memref<7x1x20xf32, #tpu.memory_space<vmem>>, vector<1x1x20xf32>
      %109 = vector.shape_cast %108 : vector<1x1x20xf32> to vector<1x20xf32>
      %cst_45 = arith.constant dense<0.000000e+00> : vector<8xf32>
      %110 = vector.multi_reduction <add>, %103, %cst_45 [1] : vector<8x20xf32> to vector<8xf32>
      %111 = vector.shape_cast %110 : vector<8xf32> to vector<8x1xf32>
      %cst_46 = arith.constant 2.000000e+01 : f32
      %112 = vector.broadcast %cst_46 : f32 to vector<8x1xf32>
      %113 = arith.divf %111, %112 : vector<8x1xf32>
      %114 = vector.broadcast %113 : vector<8x1xf32> to vector<8x20xf32>
      %115 = arith.subf %103, %114 : vector<8x20xf32>
      %116 = arith.mulf %115, %115 : vector<8x20xf32>
      %cst_47 = arith.constant dense<0.000000e+00> : vector<8xf32>
      %117 = vector.multi_reduction <add>, %116, %cst_47 [1] : vector<8x20xf32> to vector<8xf32>
      %118 = vector.shape_cast %117 : vector<8xf32> to vector<8x1xf32>
      %cst_48 = arith.constant 2.000000e+01 : f32
      %119 = vector.broadcast %cst_48 : f32 to vector<8x1xf32>
      %120 = arith.divf %118, %119 : vector<8x1xf32>
      %121 = vector.broadcast %113 : vector<8x1xf32> to vector<8x20xf32>
      %122 = arith.subf %103, %121 : vector<8x20xf32>
      %cst_49 = arith.constant 9.99999974E-6 : f32
      %123 = vector.broadcast %cst_49 : f32 to vector<8x1xf32>
      %124 = arith.addf %120, %123 : vector<8x1xf32>
      %125 = math.rsqrt %124 : vector<8x1xf32>
      %126 = vector.broadcast %125 : vector<8x1xf32> to vector<8x20xf32>
      %127 = arith.mulf %122, %126 : vector<8x20xf32>
      %128 = vector.broadcast %106 : vector<1x20xf32> to vector<8x20xf32>
      %129 = arith.mulf %127, %128 : vector<8x20xf32>
      %130 = vector.broadcast %109 : vector<1x20xf32> to vector<8x20xf32>
      %131 = arith.addf %129, %130 : vector<8x20xf32>
      %132 = arith.index_cast %arg21 : i32 to index
      %c0_50 = arith.constant 0 : index
      %c0_51 = arith.constant 0 : index
      %133 = vector.load %arg12[%132, %c0_50, %c0_51] : memref<7x20x80xbf16, #tpu.memory_space<vmem>>, vector<1x20x80xbf16>
      %134 = vector.shape_cast %133 : vector<1x20x80xbf16> to vector<20x80xbf16>
      %135 = arith.truncf %131 : vector<8x20xf32> to vector<8x20xbf16>
      %cst_52 = arith.constant dense<0.000000e+00> : vector<8x80xf32>
      %136 = tpu.matmul %135, %134, %cst_52 {dimension_numbers = #tpu.dot_dimension_numbers<[1], [0], [0], [1], [0, 0, 1, 1], [], []>} : vector<8x20xbf16>, vector<20x80xbf16>, vector<8x80xf32> -> vector<8x80xf32>
      %137 = arith.index_cast %arg21 : i32 to index
      %c0_53 = arith.constant 0 : index
      %c0_54 = arith.constant 0 : index
      %138 = vector.load %arg13[%137, %c0_53, %c0_54] : memref<7x1x80xf32, #tpu.memory_space<vmem>>, vector<1x1x80xf32>
      %139 = vector.shape_cast %138 : vector<1x1x80xf32> to vector<1x80xf32>
      %140 = vector.broadcast %139 : vector<1x80xf32> to vector<8x80xf32>
      %141 = arith.addf %136, %140 : vector<8x80xf32>
      %cst_55 = arith.constant 0.000000e+00 : f32
      %142 = vector.broadcast %cst_55 : f32 to vector<8x80xf32>
      %143 = arith.maximumf %141, %142 : vector<8x80xf32>
      %144 = arith.index_cast %arg21 : i32 to index
      %c0_56 = arith.constant 0 : index
      %c0_57 = arith.constant 0 : index
      %145 = vector.load %arg14[%144, %c0_56, %c0_57] : memref<7x80x20xbf16, #tpu.memory_space<vmem>>, vector<1x80x20xbf16>
      %146 = vector.shape_cast %145 : vector<1x80x20xbf16> to vector<80x20xbf16>
      %147 = arith.truncf %143 : vector<8x80xf32> to vector<8x80xbf16>
      %cst_58 = arith.constant dense<0.000000e+00> : vector<8x20xf32>
      %148 = tpu.matmul %147, %146, %cst_58 {dimension_numbers = #tpu.dot_dimension_numbers<[1], [0], [0], [1], [0, 0, 1, 1], [], []>} : vector<8x80xbf16>, vector<80x20xbf16>, vector<8x20xf32> -> vector<8x20xf32>
      %149 = arith.index_cast %arg21 : i32 to index
      %c0_59 = arith.constant 0 : index
      %c0_60 = arith.constant 0 : index
      %150 = vector.load %arg15[%149, %c0_59, %c0_60] : memref<7x1x20xf32, #tpu.memory_space<vmem>>, vector<1x1x20xf32>
      %151 = vector.shape_cast %150 : vector<1x1x20xf32> to vector<1x20xf32>
      %152 = vector.broadcast %151 : vector<1x20xf32> to vector<8x20xf32>
      %153 = arith.addf %148, %152 : vector<8x20xf32>
      %154 = arith.addf %153, %131 : vector<8x20xf32>
      %155 = arith.index_cast %arg21 : i32 to index
      %c0_61 = arith.constant 0 : index
      %c0_62 = arith.constant 0 : index
      %156 = vector.load %arg16[%155, %c0_61, %c0_62] : memref<7x1x20xf32, #tpu.memory_space<vmem>>, vector<1x1x20xf32>
      %157 = vector.shape_cast %156 : vector<1x1x20xf32> to vector<1x20xf32>
      %158 = arith.index_cast %arg21 : i32 to index
      %c0_63 = arith.constant 0 : index
      %c0_64 = arith.constant 0 : index
      %159 = vector.load %arg17[%158, %c0_63, %c0_64] : memref<7x1x20xf32, #tpu.memory_space<vmem>>, vector<1x1x20xf32>
      %160 = vector.shape_cast %159 : vector<1x1x20xf32> to vector<1x20xf32>
      %cst_65 = arith.constant dense<0.000000e+00> : vector<8xf32>
      %161 = vector.multi_reduction <add>, %154, %cst_65 [1] : vector<8x20xf32> to vector<8xf32>
      %162 = vector.shape_cast %161 : vector<8xf32> to vector<8x1xf32>
      %cst_66 = arith.constant 2.000000e+01 : f32
      %163 = vector.broadcast %cst_66 : f32 to vector<8x1xf32>
      %164 = arith.divf %162, %163 : vector<8x1xf32>
      %165 = vector.broadcast %164 : vector<8x1xf32> to vector<8x20xf32>
      %166 = arith.subf %154, %165 : vector<8x20xf32>
      %167 = arith.mulf %166, %166 : vector<8x20xf32>
      %cst_67 = arith.constant dense<0.000000e+00> : vector<8xf32>
      %168 = vector.multi_reduction <add>, %167, %cst_67 [1] : vector<8x20xf32> to vector<8xf32>
      %169 = vector.shape_cast %168 : vector<8xf32> to vector<8x1xf32>
      %cst_68 = arith.constant 2.000000e+01 : f32
      %170 = vector.broadcast %cst_68 : f32 to vector<8x1xf32>
      %171 = arith.divf %169, %170 : vector<8x1xf32>
      %172 = vector.broadcast %164 : vector<8x1xf32> to vector<8x20xf32>
      %173 = arith.subf %154, %172 : vector<8x20xf32>
      %cst_69 = arith.constant 9.99999974E-6 : f32
      %174 = vector.broadcast %cst_69 : f32 to vector<8x1xf32>
      %175 = arith.addf %171, %174 : vector<8x1xf32>
      %176 = math.rsqrt %175 : vector<8x1xf32>
      %177 = vector.broadcast %176 : vector<8x1xf32> to vector<8x20xf32>
      %178 = arith.mulf %173, %177 : vector<8x20xf32>
      %179 = vector.broadcast %157 : vector<1x20xf32> to vector<8x20xf32>
      %180 = arith.mulf %178, %179 : vector<8x20xf32>
      %181 = vector.broadcast %160 : vector<1x20xf32> to vector<8x20xf32>
      %182 = arith.addf %180, %181 : vector<8x20xf32>
      scf.yield %182 : vector<8x20xf32>
    }
    %c7_i32_3 = arith.constant 7 : i32
    %c0_4 = arith.constant 0 : index
    %c0_5 = arith.constant 0 : index
    %15 = vector.load %arg18[%c0_4, %c0_5] : memref<1x20xf32, #tpu.memory_space<vmem>>, vector<1x20xf32>
    %16 = vector.broadcast %15 : vector<1x20xf32> to vector<8x20xf32>
    %17 = arith.mulf %14, %16 : vector<8x20xf32>
    %cst = arith.constant dense<0.000000e+00> : vector<8xf32>
    %18 = vector.multi_reduction <add>, %17, %cst [1] : vector<8x20xf32> to vector<8xf32>
    %19 = vector.shape_cast %18 : vector<8xf32> to vector<8x1xf32>
    %c0_6 = arith.constant 0 : index
    %c0_7 = arith.constant 0 : index
    %20 = vector.load %arg19[%c0_6, %c0_7] : memref<1x1xf32, #tpu.memory_space<vmem>>, vector<1x1xf32>
    %21 = vector.broadcast %20 : vector<1x1xf32> to vector<8x1xf32>
    %22 = arith.addf %19, %21 : vector<8x1xf32>
    %cst_8 = arith.constant dense<0.000000e+00> : vector<1xf32>
    %23 = vector.multi_reduction <add>, %22, %cst_8 [0] : vector<8x1xf32> to vector<1xf32>
    %24 = vector.shape_cast %23 : vector<1xf32> to vector<1x1xf32>
    %cst_9 = arith.constant 1.250000e-01 : f32
    %25 = vector.broadcast %cst_9 : f32 to vector<1x1xf32>
    %26 = arith.mulf %24, %25 : vector<1x1xf32>
    %cst_10 = arith.constant 0.000000e+00 : f32
    %27 = vector.broadcast %cst_10 : f32 to vector<1x1xf32>
    %28 = arith.subf %27, %26 : vector<1x1xf32>
    %29 = math.exp %28 : vector<1x1xf32>
    %cst_11 = arith.constant 1.000000e+00 : f32
    %30 = vector.broadcast %cst_11 : f32 to vector<1x1xf32>
    %31 = arith.addf %30, %29 : vector<1x1xf32>
    %cst_12 = arith.constant 1.000000e+00 : f32
    %32 = vector.broadcast %cst_12 : f32 to vector<1x1xf32>
    %33 = arith.divf %32, %31 : vector<1x1xf32>
    %34 = vector.shape_cast %33 : vector<1x1xf32> to vector<1x1x1xf32>
    %c0_13 = arith.constant 0 : index
    %c0_14 = arith.constant 0 : index
    %c0_15 = arith.constant 0 : index
    %35 = vector.load %arg20[%c0_13, %c0_14, %c0_15] : memref<1x1x1xf32, #tpu.memory_space<vmem>>, vector<1x1x1xf32>
    tpu.vector_store %arg20[%c0_13, %c0_14, %c0_15], %34 {strides = array<i32>} : memref<1x1x1xf32, #tpu.memory_space<vmem>>, vector<1x1x1xf32>,
    return
  }
  func.func @transform_0(%arg0: i32) -> (i32, i32, i32) {
    %c0_i32 = arith.constant 0 : i32
    %c0_i32_0 = arith.constant 0 : i32
    %c0_i32_1 = arith.constant 0 : i32
    return %arg0, %c0_i32, %c0_i32_0 : i32, i32, i32
  }
  func.func @transform_1(%arg0: i32) -> (i32, i32, i32) {
    %c0_i32 = arith.constant 0 : i32
    %c0_i32_0 = arith.constant 0 : i32
    %c0_i32_1 = arith.constant 0 : i32
    %c0_i32_2 = arith.constant 0 : i32
    return %c0_i32, %c0_i32_0, %c0_i32_1 : i32, i32, i32
  }
  func.func @transform_2(%arg0: i32) -> (i32, i32, i32) {
    %c0_i32 = arith.constant 0 : i32
    %c0_i32_0 = arith.constant 0 : i32
    %c0_i32_1 = arith.constant 0 : i32
    %c0_i32_2 = arith.constant 0 : i32
    return %c0_i32, %c0_i32_0, %c0_i32_1 : i32, i32, i32
  }
  func.func @transform_3(%arg0: i32) -> (i32, i32, i32) {
    %c0_i32 = arith.constant 0 : i32
    %c0_i32_0 = arith.constant 0 : i32
    %c0_i32_1 = arith.constant 0 : i32
    %c0_i32_2 = arith.constant 0 : i32
    return %c0_i32, %c0_i32_0, %c0_i32_1 : i32, i32, i32
  }
  func.func @transform_4(%arg0: i32) -> (i32, i32, i32) {
    %c0_i32 = arith.constant 0 : i32
    %c0_i32_0 = arith.constant 0 : i32
    %c0_i32_1 = arith.constant 0 : i32
    %c0_i32_2 = arith.constant 0 : i32
    return %c0_i32, %c0_i32_0, %c0_i32_1 : i32, i32, i32
  }
  func.func @transform_5(%arg0: i32) -> (i32, i32, i32) {
    %c0_i32 = arith.constant 0 : i32
    %c0_i32_0 = arith.constant 0 : i32
    %c0_i32_1 = arith.constant 0 : i32
    %c0_i32_2 = arith.constant 0 : i32
    return %c0_i32, %c0_i32_0, %c0_i32_1 : i32, i32, i32
  }
  func.func @transform_6(%arg0: i32) -> (i32, i32, i32) {
    %c0_i32 = arith.constant 0 : i32
    %c0_i32_0 = arith.constant 0 : i32
    %c0_i32_1 = arith.constant 0 : i32
    %c0_i32_2 = arith.constant 0 : i32
    return %c0_i32, %c0_i32_0, %c0_i32_1 : i32, i32, i32
  }
  func.func @transform_7(%arg0: i32) -> (i32, i32, i32) {
    %c0_i32 = arith.constant 0 : i32
    %c0_i32_0 = arith.constant 0 : i32
    %c0_i32_1 = arith.constant 0 : i32
    %c0_i32_2 = arith.constant 0 : i32
    return %c0_i32, %c0_i32_0, %c0_i32_1 : i32, i32, i32
  }
  func.func @transform_8(%arg0: i32) -> (i32, i32, i32) {
    %c0_i32 = arith.constant 0 : i32
    %c0_i32_0 = arith.constant 0 : i32
    %c0_i32_1 = arith.constant 0 : i32
    %c0_i32_2 = arith.constant 0 : i32
    return %c0_i32, %c0_i32_0, %c0_i32_1 : i32, i32, i32
  }
  func.func @transform_9(%arg0: i32) -> (i32, i32, i32) {
    %c0_i32 = arith.constant 0 : i32
    %c0_i32_0 = arith.constant 0 : i32
    %c0_i32_1 = arith.constant 0 : i32
    %c0_i32_2 = arith.constant 0 : i32
    return %c0_i32, %c0_i32_0, %c0_i32_1 : i32, i32, i32
  }
  func.func @transform_10(%arg0: i32) -> (i32, i32, i32) {
    %c0_i32 = arith.constant 0 : i32
    %c0_i32_0 = arith.constant 0 : i32
    %c0_i32_1 = arith.constant 0 : i32
    %c0_i32_2 = arith.constant 0 : i32
    return %c0_i32, %c0_i32_0, %c0_i32_1 : i32, i32, i32
  }
  func.func @transform_11(%arg0: i32) -> (i32, i32, i32) {
    %c0_i32 = arith.constant 0 : i32
    %c0_i32_0 = arith.constant 0 : i32
    %c0_i32_1 = arith.constant 0 : i32
    %c0_i32_2 = arith.constant 0 : i32
    return %c0_i32, %c0_i32_0, %c0_i32_1 : i32, i32, i32
  }
  func.func @transform_12(%arg0: i32) -> (i32, i32, i32) {
    %c0_i32 = arith.constant 0 : i32
    %c0_i32_0 = arith.constant 0 : i32
    %c0_i32_1 = arith.constant 0 : i32
    %c0_i32_2 = arith.constant 0 : i32
    return %c0_i32, %c0_i32_0, %c0_i32_1 : i32, i32, i32
  }
  func.func @transform_13(%arg0: i32) -> (i32, i32, i32) {
    %c0_i32 = arith.constant 0 : i32
    %c0_i32_0 = arith.constant 0 : i32
    %c0_i32_1 = arith.constant 0 : i32
    %c0_i32_2 = arith.constant 0 : i32
    return %c0_i32, %c0_i32_0, %c0_i32_1 : i32, i32, i32
  }
  func.func @transform_14(%arg0: i32) -> (i32, i32, i32) {
    %c0_i32 = arith.constant 0 : i32
    %c0_i32_0 = arith.constant 0 : i32
    %c0_i32_1 = arith.constant 0 : i32
    %c0_i32_2 = arith.constant 0 : i32
    return %c0_i32, %c0_i32_0, %c0_i32_1 : i32, i32, i32
  }
  func.func @transform_15(%arg0: i32) -> (i32, i32, i32) {
    %c0_i32 = arith.constant 0 : i32
    %c0_i32_0 = arith.constant 0 : i32
    %c0_i32_1 = arith.constant 0 : i32
    %c0_i32_2 = arith.constant 0 : i32
    return %c0_i32, %c0_i32_0, %c0_i32_1 : i32, i32, i32
  }
  func.func @transform_16(%arg0: i32) -> (i32, i32, i32) {
    %c0_i32 = arith.constant 0 : i32
    %c0_i32_0 = arith.constant 0 : i32
    %c0_i32_1 = arith.constant 0 : i32
    %c0_i32_2 = arith.constant 0 : i32
    return %c0_i32, %c0_i32_0, %c0_i32_1 : i32, i32, i32
  }
  func.func @transform_17(%arg0: i32) -> (i32, i32) {
    %c0_i32 = arith.constant 0 : i32
    %c0_i32_0 = arith.constant 0 : i32
    %c0_i32_1 = arith.constant 0 : i32
    return %c0_i32, %c0_i32_0 : i32, i32
  }
  func.func @transform_18(%arg0: i32) -> (i32, i32) {
    %c0_i32 = arith.constant 0 : i32
    %c0_i32_0 = arith.constant 0 : i32
    %c0_i32_1 = arith.constant 0 : i32
    return %c0_i32, %c0_i32_0 : i32, i32
  }
  func.func @transform_19(%arg0: i32) -> (i32, i32, i32) {
    %c0_i32 = arith.constant 0 : i32
    %c0_i32_0 = arith.constant 0 : i32
    %c0_i32_1 = arith.constant 0 : i32
    return %arg0, %c0_i32, %c0_i32_0 : i32, i32, i32
  }
}

</mosaic_0001>

<llo_original>
// kernel: tpu_custom_call.1
$region0: #{tpu_custom_call.1}
  #allocation0 [shape = 'u32[]', space=smem, size = 0x4, offset = 0x4, fixed_abs, tag = 'smem constant byte address 0x4 - core index']
  #allocation1 [shape = 'u32[72,128]{1,0:T(1,128)}', space=vmem, size = 0x9000, scoped, tag = 'internal scratch']
  #allocation2 [shape = 'f32[1,1]{1,0:T(1,128)S(1)}', space=vmem, size = 0x200, scoped, tag = 'scoped memory for tpu_custom_call.1']
  %s0 = inlined_call_operand.vmem [shape: f32[2,8,20], index: 0, kind: input, shape index: {}]
  %s1 = inlined_call_operand.vmem [shape: bf16[7,20,160], index: 1, kind: input, shape index: {}]
  %s2 = inlined_call_operand.vmem [shape: f32[7,1,160], index: 2, kind: input, shape index: {}]
  %s3 = inlined_call_operand.vmem [shape: bf16[7,20,160], index: 3, kind: input, shape index: {}]
  %s4 = inlined_call_operand.vmem [shape: f32[7,1,160], index: 4, kind: input, shape index: {}]
  %s5 = inlined_call_operand.vmem [shape: bf16[7,20,160], index: 5, kind: input, shape index: {}]
  %s6 = inlined_call_operand.vmem [shape: f32[7,1,160], index: 6, kind: input, shape index: {}]
  %s7 = inlined_call_operand.vmem [shape: bf16[7,160,20], index: 7, kind: input, shape index: {}]
  %s8 = inlined_call_operand.vmem [shape: f32[7,1,20], index: 8, kind: input, shape index: {}]
  %s9 = inlined_call_operand.vmem [shape: f32[7,1,20], index: 9, kind: input, shape index: {}]
  %s10 = inlined_call_operand.vmem [shape: f32[7,1,20], index: 10, kind: input, shape index: {}]
  %s11 = inlined_call_operand.vmem [shape: bf16[7,20,80], index: 11, kind: input, shape index: {}]
  %s12 = inlined_call_operand.vmem [shape: f32[7,1,80], index: 12, kind: input, shape index: {}]
  %s13 = inlined_call_operand.vmem [shape: bf16[7,80,20], index: 13, kind: input, shape index: {}]
  %s14 = inlined_call_operand.vmem [shape: f32[7,1,20], index: 14, kind: input, shape index: {}]
  %s15 = inlined_call_operand.vmem [shape: f32[7,1,20], index: 15, kind: input, shape index: {}]
  %s16 = inlined_call_operand.vmem [shape: f32[7,1,20], index: 16, kind: input, shape index: {}]
  %s17 = inlined_call_operand.vmem [shape: f32[1,20], index: 17, kind: input, shape index: {}]
  %s18 = inlined_call_operand.<no memory space> [shape: f32[1,1], index: 18, kind: input, shape index: {}]
  %s19 = inlined_call_operand.vmem [shape: f32[2,1,1], index: 19, kind: output, shape index: {}]
  %s20 = sld [smem:[#allocation0]]
  $region116: #{tpu_custom_call.1} parent=0
    _
  %s22 = ssub.s32 1, %s20
  %s23 = scalar_select 0, %s22, %s20
  %v24 = vstv %s18
  %25 = vst [vmem:[#allocation2] sm:$0x1] %v24
  loop: start=0, step=1, limit=4
  $region2: #{tpu_custom_call.1} parent=0 // loop_pre_header
    _
  $region3: #{tpu_custom_call.1} parent=0 // loop_header
    %s27 = sphi 0, %s31
    %p28 = scmp.ge.s32.totalorder %s27, 4
    %s37 = sphi 0, %s39
    %s40 = sphi 0, %s37
    %s41 = sphi 0, %s40
    %s57 = sphi 0, %s41
    %s61 = sphi 0, %s61
    %s63 = sphi 0, %s61
    %s64 = sphi 0, %s63
    %s78 = sphi 0, %s64
    %s82 = sphi 0, %s82
    %s84 = sphi 0, %s82
    %s85 = sphi 0, %s84
    %s99 = sphi 0, %s85
    %s103 = sphi 0, %s103
    %s105 = sphi 0, %s103
    %s106 = sphi 0, %s105
    %s120 = sphi 0, %s106
    %s124 = sphi 0, %s124
    %s126 = sphi 0, %s124
    %s127 = sphi 0, %s126
    %s141 = sphi 0, %s127
    %s145 = sphi 0, %s145
    %s147 = sphi 0, %s145
    %s148 = sphi 0, %s147
    %s162 = sphi 0, %s148
    %s166 = sphi 0, %s166
    %s168 = sphi 0, %s166
    %s169 = sphi 0, %s168
    %s183 = sphi 0, %s169
    %s187 = sphi 0, %s187
    %s189 = sphi 0, %s187
    %s190 = sphi 0, %s189
    %s204 = sphi 0, %s190
    %s208 = sphi 0, %s208
    %s210 = sphi 0, %s208
    %s211 = sphi 0, %s210
    %s225 = sphi 0, %s211
    %s229 = sphi 0, %s229
    %s231 = sphi 0, %s229
    %s232 = sphi 0, %s231
    %s246 = sphi 0, %s232
    %s250 = sphi 0, %s250
    %s252 = sphi 0, %s250
    %s253 = sphi 0, %s252
    %s267 = sphi 0, %s253
    %s271 = sphi 0, %s271
    %s273 = sphi 0, %s271
    %s274 = sphi 0, %s273
    %s288 = sphi 0, %s274
    %s292 = sphi 0, %s292
    %s294 = sphi 0, %s292
    %s295 = sphi 0, %s294
    %s309 = sphi 0, %s295
    %s313 = sphi 0, %s313
    %s315 = sphi 0, %s313
    %s316 = sphi 0, %s315
    %s330 = sphi 0, %s316
    %s334 = sphi 0, %s334
    %s336 = sphi 0, %s334
    %s337 = sphi 0, %s336
    %s351 = sphi 0, %s337
    %s355 = sphi 0, %s355
    %s357 = sphi 0, %s355
    %s358 = sphi 0, %s357
    %s372 = sphi 0, %s358
    %s376 = sphi 0, %s376
    %s378 = sphi 0, %s376
    %s379 = sphi 0, %s378
    %s393 = sphi 0, %s379
    %s397 = sphi 0, %s397
    %s399 = sphi 0, %s397
    %s400 = sphi 0, %s399
    %s414 = sphi 0, %s400
    %s418 = sphi 0, %s418
    %s420 = sphi 0, %s418
    %s421 = sphi 0, %s420
    %s435 = sphi 0, %s421
    %s441 = sphi 0, %s443
    %s444 = sphi 0, %s441
    %s445 = sphi 0, %s444
    %s461 = sphi 0, %s445
  $region4: #{tpu_custom_call.1} parent=0 // loop_header_branch
    %30 = sbr.rel (%p28) target = $region8
  $region5: #{tpu_custom_call.1} parent=0 // loop_body
    %s32 = ssub.s32 %s27, 1
    %s33 = ssub.s32 %s27, 2
    %s34 = sadd.s32 %s27, 1
    %s35 = ssub.s32 %s27, %s34
    %p36 = scmp.eq.s32.totalorder %s35, 0
    %s38 = sadd.s32 %s37, 1
    %s39 = scalar_select %p36, %s37, %s38
    %p42 = pneg %p36
    %p43 = scmp.eq.s32.totalorder %s27, 1
    %p44 = por %p42, %p43
    %p45 = scmp.ne.s32.totalorder %s37, %s40
    %p46 = scmp.eq.s32.totalorder %s27, 0
    %p47 = por %p45, %p46
    %p48 = scmp.ne.s32.totalorder %s37, %s40
    %p49 = scmp.eq.s32.totalorder %s32, 1
    %p50 = por %p48, %p49
    %p51 = scmp.ne.s32.totalorder %s40, %s41
    %p52 = scmp.eq.s32.totalorder %s32, 0
    %p53 = por %p51, %p52
    %p54 = scmp.ne.s32.totalorder %s40, %s41
    %p55 = scmp.eq.s32.totalorder %s33, 1
    %p56 = por %p54, %p55
    %p58 = scmp.ne.s32.totalorder %s41, %s57
    %p59 = scmp.eq.s32.totalorder %s33, 0
    %p60 = por %p58, %p59
    %s62 = sadd.s32 %s61, 1
    %p65 = scmp.eq.s32.totalorder %s27, 1
    %p66 = scmp.ne.s32.totalorder %s61, %s63
    %p67 = scmp.eq.s32.totalorder %s27, 0
    %p68 = por %p66, %p67
    %p69 = scmp.ne.s32.totalorder %s61, %s63
    %p70 = scmp.eq.s32.totalorder %s32, 1
    %p71 = por %p69, %p70
    %p72 = scmp.ne.s32.totalorder %s63, %s64
    %p73 = scmp.eq.s32.totalorder %s32, 0
    %p74 = por %p72, %p73
    %p75 = scmp.ne.s32.totalorder %s63, %s64
    %p76 = scmp.eq.s32.totalorder %s33, 1
    %p77 = por %p75, %p76
    %p79 = scmp.ne.s32.totalorder %s64, %s78
    %p80 = scmp.eq.s32.totalorder %s33, 0
    %p81 = por %p79, %p80
    %s83 = sadd.s32 %s82, 1
    %p86 = scmp.eq.s32.totalorder %s27, 1
    %p87 = scmp.ne.s32.totalorder %s82, %s84
    %p88 = scmp.eq.s32.totalorder %s27, 0
    %p89 = por %p87, %p88
    %p90 = scmp.ne.s32.totalorder %s82, %s84
    %p91 = scmp.eq.s32.totalorder %s32, 1
    %p92 = por %p90, %p91
    %p93 = scmp.ne.s32.totalorder %s84, %s85
    %p94 = scmp.eq.s32.totalorder %s32, 0
    %p95 = por %p93, %p94
    %p96 = scmp.ne.s32.totalorder %s84, %s85
    %p97 = scmp.eq.s32.totalorder %s33, 1
    %p98 = por %p96, %p97
    %p100 = scmp.ne.s32.totalorder %s85, %s99
    %p101 = scmp.eq.s32.totalorder %s33, 0
    %p102 = por %p100, %p101
    %s104 = sadd.s32 %s103, 1
    %p107 = scmp.eq.s32.totalorder %s27, 1
    %p108 = scmp.ne.s32.totalorder %s103, %s105
    %p109 = scmp.eq.s32.totalorder %s27, 0
    %p110 = por %p108, %p109
    %p111 = scmp.ne.s32.totalorder %s103, %s105
    %p112 = scmp.eq.s32.totalorder %s32, 1
    %p113 = por %p111, %p112
    %p114 = scmp.ne.s32.totalorder %s105, %s106
    %p115 = scmp.eq.s32.totalorder %s32, 0
    %p116 = por %p114, %p115
    %p117 = scmp.ne.s32.totalorder %s105, %s106
    %p118 = scmp.eq.s32.totalorder %s33, 1
    %p119 = por %p117, %p118
    %p121 = scmp.ne.s32.totalorder %s106, %s120
    %p122 = scmp.eq.s32.totalorder %s33, 0
    %p123 = por %p121, %p122
    %s125 = sadd.s32 %s124, 1
    %p128 = scmp.eq.s32.totalorder %s27, 1
    %p129 = scmp.ne.s32.totalorder %s124, %s126
    %p130 = scmp.eq.s32.totalorder %s27, 0
    %p131 = por %p129, %p130
    %p132 = scmp.ne.s32.totalorder %s124, %s126
    %p133 = scmp.eq.s32.totalorder %s32, 1
    %p134 = por %p132, %p133
    %p135 = scmp.ne.s32.totalorder %s126, %s127
    %p136 = scmp.eq.s32.totalorder %s32, 0
    %p137 = por %p135, %p136
    %p138 = scmp.ne.s32.totalorder %s126, %s127
    %p139 = scmp.eq.s32.totalorder %s33, 1
    %p140 = por %p138, %p139
    %p142 = scmp.ne.s32.totalorder %s127, %s141
    %p143 = scmp.eq.s32.totalorder %s33, 0
    %p144 = por %p142, %p143
    %s146 = sadd.s32 %s145, 1
    %p149 = scmp.eq.s32.totalorder %s27, 1
    %p150 = scmp.ne.s32.totalorder %s145, %s147
    %p151 = scmp.eq.s32.totalorder %s27, 0
    %p152 = por %p150, %p151
    %p153 = scmp.ne.s32.totalorder %s145, %s147
    %p154 = scmp.eq.s32.totalorder %s32, 1
    %p155 = por %p153, %p154
    %p156 = scmp.ne.s32.totalorder %s147, %s148
    %p157 = scmp.eq.s32.totalorder %s32, 0
    %p158 = por %p156, %p157
    %p159 = scmp.ne.s32.totalorder %s147, %s148
    %p160 = scmp.eq.s32.totalorder %s33, 1
    %p161 = por %p159, %p160
    %p163 = scmp.ne.s32.totalorder %s148, %s162
    %p164 = scmp.eq.s32.totalorder %s33, 0
    %p165 = por %p163, %p164
    %s167 = sadd.s32 %s166, 1
    %p170 = scmp.eq.s32.totalorder %s27, 1
    %p171 = scmp.ne.s32.totalorder %s166, %s168
    %p172 = scmp.eq.s32.totalorder %s27, 0
    %p173 = por %p171, %p172
    %p174 = scmp.ne.s32.totalorder %s166, %s168
    %p175 = scmp.eq.s32.totalorder %s32, 1
    %p176 = por %p174, %p175
    %p177 = scmp.ne.s32.totalorder %s168, %s169
    %p178 = scmp.eq.s32.totalorder %s32, 0
    %p179 = por %p177, %p178
    %p180 = scmp.ne.s32.totalorder %s168, %s169
    %p181 = scmp.eq.s32.totalorder %s33, 1
    %p182 = por %p180, %p181
    %p184 = scmp.ne.s32.totalorder %s169, %s183
    %p185 = scmp.eq.s32.totalorder %s33, 0
    %p186 = por %p184, %p185
    %s188 = sadd.s32 %s187, 1
    %p191 = scmp.eq.s32.totalorder %s27, 1
    %p192 = scmp.ne.s32.totalorder %s187, %s189
    %p193 = scmp.eq.s32.totalorder %s27, 0
    %p194 = por %p192, %p193
    %p195 = scmp.ne.s32.totalorder %s187, %s189
    %p196 = scmp.eq.s32.totalorder %s32, 1
    %p197 = por %p195, %p196
    %p198 = scmp.ne.s32.totalorder %s189, %s190
    %p199 = scmp.eq.s32.totalorder %s32, 0
    %p200 = por %p198, %p199
    %p201 = scmp.ne.s32.totalorder %s189, %s190
    %p202 = scmp.eq.s32.totalorder %s33, 1
    %p203 = por %p201, %p202
    %p205 = scmp.ne.s32.totalorder %s190, %s204
    %p206 = scmp.eq.s32.totalorder %s33, 0
    %p207 = por %p205, %p206
    %s209 = sadd.s32 %s208, 1
    %p212 = scmp.eq.s32.totalorder %s27, 1
    %p213 = scmp.ne.s32.totalorder %s208, %s210
    %p214 = scmp.eq.s32.totalorder %s27, 0
    %p215 = por %p213, %p214
    %p216 = scmp.ne.s32.totalorder %s208, %s210
    %p217 = scmp.eq.s32.totalorder %s32, 1
    %p218 = por %p216, %p217
    %p219 = scmp.ne.s32.totalorder %s210, %s211
    %p220 = scmp.eq.s32.totalorder %s32, 0
    %p221 = por %p219, %p220
    %p222 = scmp.ne.s32.totalorder %s210, %s211
    %p223 = scmp.eq.s32.totalorder %s33, 1
    %p224 = por %p222, %p223
    %p226 = scmp.ne.s32.totalorder %s211, %s225
    %p227 = scmp.eq.s32.totalorder %s33, 0
    %p228 = por %p226, %p227
    %s230 = sadd.s32 %s229, 1
    %p233 = scmp.eq.s32.totalorder %s27, 1
    %p234 = scmp.ne.s32.totalorder %s229, %s231
    %p235 = scmp.eq.s32.totalorder %s27, 0
    %p236 = por %p234, %p235
    %p237 = scmp.ne.s32.totalorder %s229, %s231
    %p238 = scmp.eq.s32.totalorder %s32, 1
    %p239 = por %p237, %p238
    %p240 = scmp.ne.s32.totalorder %s231, %s232
    %p241 = scmp.eq.s32.totalorder %s32, 0
    %p242 = por %p240, %p241
    %p243 = scmp.ne.s32.totalorder %s231, %s232
    %p244 = scmp.eq.s32.totalorder %s33, 1
    %p245 = por %p243, %p244
    %p247 = scmp.ne.s32.totalorder %s232, %s246
    %p248 = scmp.eq.s32.totalorder %s33, 0
    %p249 = por %p247, %p248
    %s251 = sadd.s32 %s250, 1
    %p254 = scmp.eq.s32.totalorder %s27, 1
    %p255 = scmp.ne.s32.totalorder %s250, %s252
    %p256 = scmp.eq.s32.totalorder %s27, 0
    %p257 = por %p255, %p256
    %p258 = scmp.ne.s32.totalorder %s250, %s252
    %p259 = scmp.eq.s32.totalorder %s32, 1
    %p260 = por %p258, %p259
    %p261 = scmp.ne.s32.totalorder %s252, %s253
    %p262 = scmp.eq.s32.totalorder %s32, 0
    %p263 = por %p261, %p262
    %p264 = scmp.ne.s32.totalorder %s252, %s253
    %p265 = scmp.eq.s32.totalorder %s33, 1
    %p266 = por %p264, %p265
    %p268 = scmp.ne.s32.totalorder %s253, %s267
    %p269 = scmp.eq.s32.totalorder %s33, 0
    %p270 = por %p268, %p269
    %s272 = sadd.s32 %s271, 1
    %p275 = scmp.eq.s32.totalorder %s27, 1
    %p276 = scmp.ne.s32.totalorder %s271, %s273
    %p277 = scmp.eq.s32.totalorder %s27, 0
    %p278 = por %p276, %p277
    %p279 = scmp.ne.s32.totalorder %s271, %s273
    %p280 = scmp.eq.s32.totalorder %s32, 1
    %p281 = por %p279, %p280
    %p282 = scmp.ne.s32.totalorder %s273, %s274
    %p283 = scmp.eq.s32.totalorder %s32, 0
    %p284 = por %p282, %p283
    %p285 = scmp.ne.s32.totalorder %s273, %s274
    %p286 = scmp.eq.s32.totalorder %s33, 1
    %p287 = por %p285, %p286
    %p289 = scmp.ne.s32.totalorder %s274, %s288
    %p290 = scmp.eq.s32.totalorder %s33, 0
    %p291 = por %p289, %p290
    %s293 = sadd.s32 %s292, 1
    %p296 = scmp.eq.s32.totalorder %s27, 1
    %p297 = scmp.ne.s32.totalorder %s292, %s294
    %p298 = scmp.eq.s32.totalorder %s27, 0
    %p299 = por %p297, %p298
    %p300 = scmp.ne.s32.totalorder %s292, %s294
    %p301 = scmp.eq.s32.totalorder %s32, 1
    %p302 = por %p300, %p301
    %p303 = scmp.ne.s32.totalorder %s294, %s295
    %p304 = scmp.eq.s32.totalorder %s32, 0
    %p305 = por %p303, %p304
    %p306 = scmp.ne.s32.totalorder %s294, %s295
    %p307 = scmp.eq.s32.totalorder %s33, 1
    %p308 = por %p306, %p307
    %p310 = scmp.ne.s32.totalorder %s295, %s309
    %p311 = scmp.eq.s32.totalorder %s33, 0
    %p312 = por %p310, %p311
    %s314 = sadd.s32 %s313, 1
    %p317 = scmp.eq.s32.totalorder %s27, 1
    %p318 = scmp.ne.s32.totalorder %s313, %s315
    %p319 = scmp.eq.s32.totalorder %s27, 0
    %p320 = por %p318, %p319
    %p321 = scmp.ne.s32.totalorder %s313, %s315
    %p322 = scmp.eq.s32.totalorder %s32, 1
    %p323 = por %p321, %p322
    %p324 = scmp.ne.s32.totalorder %s315, %s316
    %p325 = scmp.eq.s32.totalorder %s32, 0
    %p326 = por %p324, %p325
    %p327 = scmp.ne.s32.totalorder %s315, %s316
    %p328 = scmp.eq.s32.totalorder %s33, 1
    %p329 = por %p327, %p328
    %p331 = scmp.ne.s32.totalorder %s316, %s330
    %p332 = scmp.eq.s32.totalorder %s33, 0
    %p333 = por %p331, %p332
    %s335 = sadd.s32 %s334, 1
    %p338 = scmp.eq.s32.totalorder %s27, 1
    %p339 = scmp.ne.s32.totalorder %s334, %s336
    %p340 = scmp.eq.s32.totalorder %s27, 0
    %p341 = por %p339, %p340
    %p342 = scmp.ne.s32.totalorder %s334, %s336
    %p343 = scmp.eq.s32.totalorder %s32, 1
    %p344 = por %p342, %p343
    %p345 = scmp.ne.s32.totalorder %s336, %s337
    %p346 = scmp.eq.s32.totalorder %s32, 0
    %p347 = por %p345, %p346
    %p348 = scmp.ne.s32.totalorder %s336, %s337
    %p349 = scmp.eq.s32.totalorder %s33, 1
    %p350 = por %p348, %p349
    %p352 = scmp.ne.s32.totalorder %s337, %s351
    %p353 = scmp.eq.s32.totalorder %s33, 0
    %p354 = por %p352, %p353
    %s356 = sadd.s32 %s355, 1
    %p359 = scmp.eq.s32.totalorder %s27, 1
    %p360 = scmp.ne.s32.totalorder %s355, %s357
    %p361 = scmp.eq.s32.totalorder %s27, 0
    %p362 = por %p360, %p361
    %p363 = scmp.ne.s32.totalorder %s355, %s357
    %p364 = scmp.eq.s32.totalorder %s32, 1
    %p365 = por %p363, %p364
    %p366 = scmp.ne.s32.totalorder %s357, %s358
    %p367 = scmp.eq.s32.totalorder %s32, 0
    %p368 = por %p366, %p367
    %p369 = scmp.ne.s32.totalorder %s357, %s358
    %p370 = scmp.eq.s32.totalorder %s33, 1
    %p371 = por %p369, %p370
    %p373 = scmp.ne.s32.totalorder %s358, %s372
    %p374 = scmp.eq.s32.totalorder %s33, 0
    %p375 = por %p373, %p374
    %s377 = sadd.s32 %s376, 1
    %p380 = scmp.eq.s32.totalorder %s27, 1
    %p381 = scmp.ne.s32.totalorder %s376, %s378
    %p382 = scmp.eq.s32.totalorder %s27, 0
    %p383 = por %p381, %p382
    %p384 = scmp.ne.s32.totalorder %s376, %s378
    %p385 = scmp.eq.s32.totalorder %s32, 1
    %p386 = por %p384, %p385
    %p387 = scmp.ne.s32.totalorder %s378, %s379
    %p388 = scmp.eq.s32.totalorder %s32, 0
    %p389 = por %p387, %p388
    %p390 = scmp.ne.s32.totalorder %s378, %s379
    %p391 = scmp.eq.s32.totalorder %s33, 1
    %p392 = por %p390, %p391
    %p394 = scmp.ne.s32.totalorder %s379, %s393
    %p395 = scmp.eq.s32.totalorder %s33, 0
    %p396 = por %p394, %p395
    %s398 = sadd.s32 %s397, 1
    %p401 = scmp.eq.s32.totalorder %s27, 1
    %p402 = scmp.ne.s32.totalorder %s397, %s399
    %p403 = scmp.eq.s32.totalorder %s27, 0
    %p404 = por %p402, %p403
    %p405 = scmp.ne.s32.totalorder %s397, %s399
    %p406 = scmp.eq.s32.totalorder %s32, 1
    %p407 = por %p405, %p406
    %p408 = scmp.ne.s32.totalorder %s399, %s400
    %p409 = scmp.eq.s32.totalorder %s32, 0
    %p410 = por %p408, %p409
    %p411 = scmp.ne.s32.totalorder %s399, %s400
    %p412 = scmp.eq.s32.totalorder %s33, 1
    %p413 = por %p411, %p412
    %p415 = scmp.ne.s32.totalorder %s400, %s414
    %p416 = scmp.eq.s32.totalorder %s33, 0
    %p417 = por %p415, %p416
    %s419 = sadd.s32 %s418, 1
    %p422 = scmp.eq.s32.totalorder %s27, 1
    %p423 = scmp.ne.s32.totalorder %s418, %s420
    %p424 = scmp.eq.s32.totalorder %s27, 0
    %p425 = por %p423, %p424
    %p426 = scmp.ne.s32.totalorder %s418, %s420
    %p427 = scmp.eq.s32.totalorder %s32, 1
    %p428 = por %p426, %p427
    %p429 = scmp.ne.s32.totalorder %s420, %s421
    %p430 = scmp.eq.s32.totalorder %s32, 0
    %p431 = por %p429, %p430
    %p432 = scmp.ne.s32.totalorder %s420, %s421
    %p433 = scmp.eq.s32.totalorder %s33, 1
    %p434 = por %p432, %p433
    %p436 = scmp.ne.s32.totalorder %s421, %s435
    %p437 = scmp.eq.s32.totalorder %s33, 0
    %p438 = por %p436, %p437
    %s439 = ssub.s32 %s27, %s34
    %p440 = scmp.eq.s32.totalorder %s439, 0
    %s442 = sadd.s32 %s441, 1
    %s443 = scalar_select %p440, %s441, %s442
    %p446 = pneg %p440
    %p447 = scmp.eq.s32.totalorder %s27, 1
    %p448 = por %p446, %p447
    %p449 = scmp.ne.s32.totalorder %s441, %s444
    %p450 = scmp.eq.s32.totalorder %s27, 0
    %p451 = por %p449, %p450
    %p452 = scmp.ne.s32.totalorder %s441, %s444
    %p453 = scmp.eq.s32.totalorder %s32, 1
    %p454 = por %p452, %p453
    %p455 = scmp.ne.s32.totalorder %s444, %s445
    %p456 = scmp.eq.s32.totalorder %s32, 0
    %p457 = por %p455, %p456
    %p458 = scmp.ne.s32.totalorder %s444, %s445
    %p459 = scmp.eq.s32.totalorder %s33, 1
    %p460 = por %p458, %p459
    %p462 = scmp.ne.s32.totalorder %s445, %s461
    %p463 = scmp.eq.s32.totalorder %s33, 0
    %p464 = por %p462, %p463
    %p465 = scmp.le.s32.totalorder 1, %s27
    %p466 = scmp.lt.s32.totalorder %s27, 3
    %p467 = pnand %p465, %p466
    %p468 = pneg %p467
    // Predicated region
    $region9: #{tpu_custom_call.1} parent=5 // pred_check
      _
    $region10: #{tpu_custom_call.1} parent=5 // pred_check_branch
      %470 = sbr.rel (%p467) target = $region12
    $region11: #{tpu_custom_call.1} parent=5 // pred_region
      %s471 = ssub.s32 %s27, 1
      // Predicated region
      $region13: #{tpu_custom_call.1} parent=11 // pred_check
        %p472 = pneg %p74
      $region14: #{tpu_custom_call.1} parent=11 // pred_check_branch
        %474 = sbr.rel (%p472) target = $region16
      $region15: #{tpu_custom_call.1} parent=11 // pred_region
        _
      $region16: #{tpu_custom_call.1} parent=11 // pred_fallthru
        _
      // Predicated region
      $region17: #{tpu_custom_call.1} parent=11 // pred_check
        %p475 = pneg %p95
      $region18: #{tpu_custom_call.1} parent=11 // pred_check_branch
        %477 = sbr.rel (%p475) target = $region20
      $region19: #{tpu_custom_call.1} parent=11 // pred_region
        _
      $region20: #{tpu_custom_call.1} parent=11 // pred_fallthru
        _
      // Predicated region
      $region21: #{tpu_custom_call.1} parent=11 // pred_check
        %p478 = pneg %p116
      $region22: #{tpu_custom_call.1} parent=11 // pred_check_branch
        %480 = sbr.rel (%p478) target = $region24
      $region23: #{tpu_custom_call.1} parent=11 // pred_region
        _
      $region24: #{tpu_custom_call.1} parent=11 // pred_fallthru
        _
      // Predicated region
      $region25: #{tpu_custom_call.1} parent=11 // pred_check
        %p481 = pneg %p137
      $region26: #{tpu_custom_call.1} parent=11 // pred_check_branch
        %483 = sbr.rel (%p481) target = $region28
      $region27: #{tpu_custom_call.1} parent=11 // pred_region
        _
      $region28: #{tpu_custom_call.1} parent=11 // pred_fallthru
        _
      // Predicated region
      $region29: #{tpu_custom_call.1} parent=11 // pred_check
        %p484 = pneg %p158
      $region30: #{tpu_custom_call.1} parent=11 // pred_check_branch
        %486 = sbr.rel (%p484) target = $region32
      $region31: #{tpu_custom_call.1} parent=11 // pred_region
        _
      $region32: #{tpu_custom_call.1} parent=11 // pred_fallthru
        _
      // Predicated region
      $region33: #{tpu_custom_call.1} parent=11 // pred_check
        %p487 = pneg %p179
      $region34: #{tpu_custom_call.1} parent=11 // pred_check_branch
        %489 = sbr.rel (%p487) target = $region36
      $region35: #{tpu_custom_call.1} parent=11 // pred_region
        _
      $region36: #{tpu_custom_call.1} parent=11 // pred_fallthru
        _
      // Predicated region
      $region37: #{tpu_custom_call.1} parent=11 // pred_check
        %p490 = pneg %p200
      $region38: #{tpu_custom_call.1} parent=11 // pred_check_branch
        %492 = sbr.rel (%p490) target = $region40
      $region39: #{tpu_custom_call.1} parent=11 // pred_region
        _
      $region40: #{tpu_custom_call.1} parent=11 // pred_fallthru
        _
      // Predicated region
      $region41: #{tpu_custom_call.1} parent=11 // pred_check
        %p493 = pneg %p221
      $region42: #{tpu_custom_call.1} parent=11 // pred_check_branch
        %495 = sbr.rel (%p493) target = $region44
      $region43: #{tpu_custom_call.1} parent=11 // pred_region
        _
      $region44: #{tpu_custom_call.1} parent=11 // pred_fallthru
        _
      // Predicated region
      $region45: #{tpu_custom_call.1} parent=11 // pred_check
        %p496 = pneg %p242
      $region46: #{tpu_custom_call.1} parent=11 // pred_check_branch
        %498 = sbr.rel (%p496) target = $region48
      $region47: #{tpu_custom_call.1} parent=11 // pred_region
        _
      $region48: #{tpu_custom_call.1} parent=11 // pred_fallthru
        _
      // Predicated region
      $region49: #{tpu_custom_call.1} parent=11 // pred_check
        %p499 = pneg %p263
      $region50: #{tpu_custom_call.1} parent=11 // pred_check_branch
        %501 = sbr.rel (%p499) target = $region52
      $region51: #{tpu_custom_call.1} parent=11 // pred_region
        _
      $region52: #{tpu_custom_call.1} parent=11 // pred_fallthru
        _
      // Predicated region
      $region53: #{tpu_custom_call.1} parent=11 // pred_check
        %p502 = pneg %p284
      $region54: #{tpu_custom_call.1} parent=11 // pred_check_branch
        %504 = sbr.rel (%p502) target = $region56
      $region55: #{tpu_custom_call.1} parent=11 // pred_region
        _
      $region56: #{tpu_custom_call.1} parent=11 // pred_fallthru
        _
      // Predicated region
      $region57: #{tpu_custom_call.1} parent=11 // pred_check
        %p505 = pneg %p305
      $region58: #{tpu_custom_call.1} parent=11 // pred_check_branch
        %507 = sbr.rel (%p505) target = $region60
      $region59: #{tpu_custom_call.1} parent=11 // pred_region
        _
      $region60: #{tpu_custom_call.1} parent=11 // pred_fallthru
        _
      // Predicated region
      $region61: #{tpu_custom_call.1} parent=11 // pred_check
        %p508 = pneg %p326
      $region62: #{tpu_custom_call.1} parent=11 // pred_check_branch
        %510 = sbr.rel (%p508) target = $region64
      $region63: #{tpu_custom_call.1} parent=11 // pred_region
        _
      $region64: #{tpu_custom_call.1} parent=11 // pred_fallthru
        _
      // Predicated region
      $region65: #{tpu_custom_call.1} parent=11 // pred_check
        %p511 = pneg %p347
      $region66: #{tpu_custom_call.1} parent=11 // pred_check_branch
        %513 = sbr.rel (%p511) target = $region68
      $region67: #{tpu_custom_call.1} parent=11 // pred_region
        _
      $region68: #{tpu_custom_call.1} parent=11 // pred_fallthru
        _
      // Predicated region
      $region69: #{tpu_custom_call.1} parent=11 // pred_check
        %p514 = pneg %p368
      $region70: #{tpu_custom_call.1} parent=11 // pred_check_branch
        %516 = sbr.rel (%p514) target = $region72
      $region71: #{tpu_custom_call.1} parent=11 // pred_region
        _
      $region72: #{tpu_custom_call.1} parent=11 // pred_fallthru
        _
      // Predicated region
      $region73: #{tpu_custom_call.1} parent=11 // pred_check
        %p517 = pneg %p389
      $region74: #{tpu_custom_call.1} parent=11 // pred_check_branch
        %519 = sbr.rel (%p517) target = $region76
      $region75: #{tpu_custom_call.1} parent=11 // pred_region
        _
      $region76: #{tpu_custom_call.1} parent=11 // pred_fallthru
        _
      // Predicated region
      $region77: #{tpu_custom_call.1} parent=11 // pred_check
        %p520 = pneg %p410
      $region78: #{tpu_custom_call.1} parent=11 // pred_check_branch
        %522 = sbr.rel (%p520) target = $region80
      $region79: #{tpu_custom_call.1} parent=11 // pred_region
        _
      $region80: #{tpu_custom_call.1} parent=11 // pred_fallthru
        _
      // Predicated region
      $region81: #{tpu_custom_call.1} parent=11 // pred_check
        %p523 = pneg %p431
      $region82: #{tpu_custom_call.1} parent=11 // pred_check_branch
        %525 = sbr.rel (%p523) target = $region84
      $region83: #{tpu_custom_call.1} parent=11 // pred_region
        _
      $region84: #{tpu_custom_call.1} parent=11 // pred_fallthru
        _
    $region12: #{tpu_custom_call.1} parent=5 // pred_fallthru
      _
    %p526 = scmp.lt.s32.totalorder %s27, 2
    // Predicated region
    $region85: #{tpu_custom_call.1} parent=5 // pred_check
      %p527 = pneg %p526
    $region86: #{tpu_custom_call.1} parent=5 // pred_check_branch
      %529 = sbr.rel (%p527) target = $region88
    $region87: #{tpu_custom_call.1} parent=5 // pred_region
      // Predicated region
      $region89: #{tpu_custom_call.1} parent=87 // pred_check
        %p530 = pneg %p47
      $region90: #{tpu_custom_call.1} parent=87 // pred_check_branch
        %532 = sbr.rel (%p530) target = $region92
      $region91: #{tpu_custom_call.1} parent=87 // pred_region
        %p533 = scmp.lt.s32.totalorder %s27, 1
        %s534 = scalar_select %p533, %s27, 1
        %s535 = smul.addr %s534, 8
        %s536 = scalar_lea.vmem %s0, %s535
      $region92: #{tpu_custom_call.1} parent=87 // pred_fallthru
        _
    $region88: #{tpu_custom_call.1} parent=5 // pred_fallthru
      _
    %p537 = scmp.le.s32.totalorder 1, %s27
    %p538 = scmp.lt.s32.totalorder %s27, 3
    %p539 = pnand %p537, %p538
    %p540 = pneg %p539
    // Predicated region
    $region93: #{tpu_custom_call.1} parent=5 // pred_check
      _
    $region94: #{tpu_custom_call.1} parent=5 // pred_check_branch
      %542 = sbr.rel (%p539) target = $region96
    $region95: #{tpu_custom_call.1} parent=5 // pred_region
      %s543 = ssub.s32 %s27, 1
      %p544 = scmp.lt.s32.totalorder %s32, 1
      %s545 = scalar_select %p544, %s32, 1
      %s546 = smul.addr %s545, 8
      %s547 = scalar_lea.vmem %s0, %s546
      %p548 = pneg %p53
      %p549 = pneg %p50
      %p550 = pneg %p74
      %p551 = pneg %p71
      %p552 = pneg %p95
      %p553 = pneg %p92
      %p554 = pneg %p116
      %p555 = pneg %p113
      %p556 = pneg %p137
      %p557 = pneg %p134
      %p558 = pneg %p158
      %p559 = pneg %p155
      %p560 = pneg %p179
      %p561 = pneg %p176
      %p562 = pneg %p200
      %p563 = pneg %p197
      %p564 = pneg %p221
      %p565 = pneg %p218
      %p566 = pneg %p242
      %p567 = pneg %p239
      %p568 = pneg %p263
      %p569 = pneg %p260
      %p570 = pneg %p284
      %p571 = pneg %p281
      %p572 = pneg %p305
      %p573 = pneg %p302
      %p574 = pneg %p326
      %p575 = pneg %p323
      %p576 = pneg %p347
      %p577 = pneg %p344
      %p578 = pneg %p368
      %p579 = pneg %p365
      %p580 = pneg %p389
      %p581 = pneg %p386
      %p582 = pneg %p410
      %p583 = pneg %p407
      %p584 = pneg %p431
      %p585 = pneg %p428
      %p586 = pneg %p457
      %p587 = pneg %p454
      %p588 = scmp.lt.s32.totalorder %s32, 1
      %s589 = scalar_select %p588, %s32, 1
      %s590 = scalar_lea.vmem %s19, %s589
      %p591 = scmp.lt.s32.totalorder %s32, 1
      %s592 = scalar_select %p591, %s32, 1
      %s593 = smul.addr %s592, 8
      %s594 = scalar_lea.vmem %s0, %s593
      %p595 = scmp.lt.s32.totalorder %s32, 1
      %s596 = scalar_select %p595, %s32, 1
      %s597 = scalar_lea.vmem %s19, %s596
      %v599 = vlaneseq
      %v600 = vand.u32 %v599, 127
      %v601 = vadd.s32 %v600, 128
      %v602 = vlaneseq
      %v603 = vshrl.u32 %v602, 7
      %v604 = vmul.u32 %v603, 20
      %vm605 = vcmp.ge.s32.totalorder %v600, %v604
      %vm606 = vcmp.ge.s32.totalorder %v601, %v604
      %v607 = vadd.s32 %v604, 20
      %vm608 = vcmp.lt.s32.totalorder %v600, %v607
      %vm609 = vcmp.lt.s32.totalorder %v601, %v607
      %vm610 = vmand %vm605, %vm608
      %vm611 = vmand %vm606, %vm609
      %v612 = vsel %vm610, 1, 0
      %v613 = vsel %vm611, 1, 0
      %v614 = vcvt.s32.f32 %v612
      %v615 = vcvt.s32.f32 %v613
      %v616 = vld [vmem:[%s594] sm:$0xff]
      loop: start=0, step=1, limit=7
      $region97: #{tpu_custom_call.1} parent=95 // loop_pre_header
        _
      $region98: #{tpu_custom_call.1} parent=95 // loop_header
        %s618 = sphi 0, %s622
        %p619 = scmp.ge.s32.totalorder %s618, 7
        %v623 = vphi %v616, %v1625
      $region99: #{tpu_custom_call.1} parent=95 // loop_header_branch
        %621 = sbr.rel (%p619) target = $region103
      $region100: #{tpu_custom_call.1} parent=95 // loop_body
        %s624 = smul.u32 %s618, 6
        %s625 = smul.addr %s624, 4
        %s626 = scalar_lea.vmem %s1, %s625
        %v627 = vld [vmem:[%s626] sm:$0xff]
        %v628 = vld [vmem:[%s626 + $0x8] sm:$0xff]
        %v629 = vld [vmem:[%s626 + $0x10] sm:$0x33]
        %v630 = vpack.c.bf16 %v623, %v623
        %s631 = smul.u32 %s618, 2
        %s632 = scalar_lea.vmem %s2, %s631
        %v633 = vld [vmem:[%s632] sm:$0x3]
        %v635 = vperm.slane %v633, 0
        %v636 = vperm.slane %v633, 1
        %v642 = vunpack.c.l.b16 %v627
        %v643 = vunpack.c.h.b16 %v627
        %v644 = vunpack.c.l.b16 %v628
        %v645 = vunpack.c.h.b16 %v628
        %v646 = vunpack.c.l.b16 %v629
        %v647 = vunpack.c.h.b16 %v629
        %v648 = vpack.c.b16 %v644, %v642
        %v649 = vpack.c.b16 %v645, %v643
        %v650 = vpack.c.b16 %v646, %v646
        %v651 = vpack.c.b16 %v647, %v647
        %vm654 = vcmask 162816
        %v656 = vsel %vm654, %v630, 0
        %vm658 = vcmask 1041408
        %v660 = vsel %vm658, %v650, 0
        %v663 = vsel %vm658, %v651, 0
        %665 = vmatpush.bf16.msra.mxu0 0
        %666 = vmatpush.bf16.msra.mxu0 0
        %667 = vmatpush.bf16.msra.mxu0 0
        %668 = vmatpush.bf16.msra.mxu0 0
        %669 = vmatpush.bf16.msra.mxu0 0
        %670 = vmatpush.bf16.msra.mxu0 0
        %671 = vmatpush.bf16.msra.mxu0 %v660
        %672 = vmatpush.bf16.msra.mxu0 %v648
        %673 = vmatmul.bf16.gmra.mxu0 %v656
        %v674 = vpop.f32.mrf.mxu0
        %v675 = vadd.f32 %v635, %v674
        %v676 = vpop.f32.mrf.mxu0
        %677 = vdwg.mxu0
        %678 = vmatpush.bf16.msra.mxu0 0
        %679 = vmatpush.bf16.msra.mxu0 0
        %680 = vmatpush.bf16.msra.mxu0 0
        %681 = vmatpush.bf16.msra.mxu0 0
        %682 = vmatpush.bf16.msra.mxu0 0
        %683 = vmatpush.bf16.msra.mxu0 0
        %684 = vmatpush.bf16.msra.mxu0 %v663
        %685 = vmatpush.bf16.msra.mxu0 %v649
        %686 = vmatmul.bf16.gmra.mxu0 %v656
        %v687 = vpop.f32.mrf.mxu0
        %v688 = vadd.f32 %v636, %v687
        %v689 = vpop.f32.mrf.mxu0
        %690 = vdwg.mxu0
        %s691 = smul.addr %s624, 4
        %s692 = scalar_lea.vmem %s3, %s691
        %v693 = vld [vmem:[%s692] sm:$0xff]
        %v694 = vld [vmem:[%s692 + $0x8] sm:$0xff]
        %v695 = vld [vmem:[%s692 + $0x10] sm:$0x33]
        %s696 = scalar_lea.vmem %s4, %s631
        %v697 = vld [vmem:[%s696] sm:$0x3]
        %v699 = vperm.slane %v697, 0
        %v700 = vperm.slane %v697, 1
        %v706 = vunpack.c.l.b16 %v693
        %v707 = vunpack.c.h.b16 %v693
        %v708 = vunpack.c.l.b16 %v694
        %v709 = vunpack.c.h.b16 %v694
        %v710 = vunpack.c.l.b16 %v695
        %v711 = vunpack.c.h.b16 %v695
        %v712 = vpack.c.b16 %v708, %v706
        %v713 = vpack.c.b16 %v709, %v707
        %v714 = vpack.c.b16 %v710, %v710
        %v715 = vpack.c.b16 %v711, %v711
        %v719 = vsel %vm658, %v714, 0
        %v722 = vsel %vm658, %v715, 0
        %724 = vmatpush.bf16.msra.mxu0 0
        %725 = vmatpush.bf16.msra.mxu0 0
        %726 = vmatpush.bf16.msra.mxu0 0
        %727 = vmatpush.bf16.msra.mxu0 0
        %728 = vmatpush.bf16.msra.mxu0 0
        %729 = vmatpush.bf16.msra.mxu0 0
        %730 = vmatpush.bf16.msra.mxu0 %v719
        %731 = vmatpush.bf16.msra.mxu0 %v712
        %732 = vmatmul.bf16.gmra.mxu0 %v656
        %v733 = vpop.f32.mrf.mxu0
        %v734 = vadd.f32 %v699, %v733
        %v735 = vpop.f32.mrf.mxu0
        %736 = vdwg.mxu0
        %737 = vmatpush.bf16.msra.mxu0 0
        %738 = vmatpush.bf16.msra.mxu0 0
        %739 = vmatpush.bf16.msra.mxu0 0
        %740 = vmatpush.bf16.msra.mxu0 0
        %741 = vmatpush.bf16.msra.mxu0 0
        %742 = vmatpush.bf16.msra.mxu0 0
        %743 = vmatpush.bf16.msra.mxu0 %v722
        %744 = vmatpush.bf16.msra.mxu0 %v713
        %745 = vmatmul.bf16.gmra.mxu0 %v656
        %v746 = vpop.f32.mrf.mxu0
        %v747 = vadd.f32 %v700, %v746
        %v748 = vpop.f32.mrf.mxu0
        %749 = vdwg.mxu0
        %s750 = smul.addr %s624, 4
        %s751 = scalar_lea.vmem %s5, %s750
        %v752 = vld [vmem:[%s751] sm:$0xff]
        %v753 = vld [vmem:[%s751 + $0x8] sm:$0xff]
        %v754 = vld [vmem:[%s751 + $0x10] sm:$0x33]
        %s755 = scalar_lea.vmem %s6, %s631
        %v756 = vld [vmem:[%s755] sm:$0x3]
        %v758 = vperm.slane %v756, 0
        %v759 = vperm.slane %v756, 1
        %v765 = vunpack.c.l.b16 %v752
        %v766 = vunpack.c.h.b16 %v752
        %v767 = vunpack.c.l.b16 %v753
        %v768 = vunpack.c.h.b16 %v753
        %v769 = vunpack.c.l.b16 %v754
        %v770 = vunpack.c.h.b16 %v754
        %v771 = vpack.c.b16 %v767, %v765
        %v772 = vpack.c.b16 %v768, %v766
        %v773 = vpack.c.b16 %v769, %v769
        %v774 = vpack.c.b16 %v770, %v770
        %v778 = vsel %vm658, %v773, 0
        %v781 = vsel %vm658, %v774, 0
        %783 = vmatpush.bf16.msra.mxu0 0
        %784 = vmatpush.bf16.msra.mxu0 0
        %785 = vmatpush.bf16.msra.mxu0 0
        %786 = vmatpush.bf16.msra.mxu0 0
        %787 = vmatpush.bf16.msra.mxu0 0
        %788 = vmatpush.bf16.msra.mxu0 0
        %789 = vmatpush.bf16.msra.mxu0 %v778
        %790 = vmatpush.bf16.msra.mxu0 %v771
        %791 = vmatmul.bf16.gmra.mxu0 %v656
        %v792 = vpop.f32.mrf.mxu0
        %v793 = vadd.f32 %v758, %v792
        %v794 = vpop.f32.mrf.mxu0
        %795 = vdwg.mxu0
        %796 = vmatpush.bf16.msra.mxu0 0
        %797 = vmatpush.bf16.msra.mxu0 0
        %798 = vmatpush.bf16.msra.mxu0 0
        %799 = vmatpush.bf16.msra.mxu0 0
        %800 = vmatpush.bf16.msra.mxu0 0
        %801 = vmatpush.bf16.msra.mxu0 0
        %802 = vmatpush.bf16.msra.mxu0 %v781
        %803 = vmatpush.bf16.msra.mxu0 %v772
        %804 = vmatmul.bf16.gmra.mxu0 %v656
        %v805 = vpop.f32.mrf.mxu0
        %v806 = vadd.f32 %v759, %v805
        %v807 = vpop.f32.mrf.mxu0
        %808 = vdwg.mxu0
        %v811 = vrot.slane %v747, 7
        %vm812 = vcmask 1040384
        %v813 = vsel %vm812, %v734, %v811
        %vm814 = vcmask 1041409
        %v815 = vsel %vm814, %v734, %v811
        %v816 = vrot.slane %v815, 1
        %vm817 = vcmask 1042434
        %v818 = vsel %vm817, %v734, %v811
        %v819 = vrot.slane %v818, 2
        %vm820 = vcmask 1043459
        %v821 = vsel %vm820, %v734, %v811
        %v822 = vrot.slane %v821, 3
        %vm823 = vcmask 1044484
        %v824 = vsel %vm823, %v734, %v811
        %v825 = vrot.slane %v824, 4
        %vm826 = vcmask 1045509
        %v827 = vsel %vm826, %v734, %v811
        %v828 = vrot.slane %v827, 5
        %vm829 = vcmask 1046534
        %v830 = vsel %vm829, %v734, %v811
        %v831 = vrot.slane %v830, 6
        %vm832 = vcmask 1046528
        %v833 = vsel %vm832, %v811, %v734
        %v834 = vrot.slane %v833, 7
        %v835 = vperm.slane %v813, 0
        %v836 = vperm.slane %v813, 1
        %v837 = vperm.slane %v816, 0
        %v838 = vperm.slane %v816, 1
        %v839 = vperm.slane %v819, 0
        %v840 = vperm.slane %v819, 1
        %v841 = vperm.slane %v822, 0
        %v842 = vperm.slane %v822, 1
        %v843 = vperm.slane %v825, 0
        %v844 = vperm.slane %v825, 1
        %v845 = vperm.slane %v828, 0
        %v846 = vperm.slane %v828, 1
        %v847 = vperm.slane %v831, 0
        %v848 = vperm.slane %v831, 1
        %v849 = vperm.slane %v834, 0
        %v850 = vperm.slane %v834, 1
        %v867 = vmul.f32 %v835, %v614
        %v868 = vmul.f32 %v836, %v615
        %v869 = vmul.f32 %v837, %v614
        %v870 = vmul.f32 %v838, %v615
        %v871 = vmul.f32 %v839, %v614
        %v872 = vmul.f32 %v840, %v615
        %v873 = vmul.f32 %v841, %v614
        %v874 = vmul.f32 %v842, %v615
        %v875 = vmul.f32 %v843, %v614
        %v876 = vmul.f32 %v844, %v615
        %v877 = vmul.f32 %v845, %v614
        %v878 = vmul.f32 %v846, %v615
        %v879 = vmul.f32 %v847, %v614
        %v880 = vmul.f32 %v848, %v615
        %v881 = vmul.f32 %v849, %v614
        %v882 = vmul.f32 %v850, %v615
        %v883 = vpack.c.bf16 %v869, %v867
        %v884 = vpack.c.bf16 %v870, %v868
        %v885 = vpack.c.bf16 %v873, %v871
        %v886 = vpack.c.bf16 %v874, %v872
        %v887 = vpack.c.bf16 %v877, %v875
        %v888 = vpack.c.bf16 %v878, %v876
        %v889 = vpack.c.bf16 %v881, %v879
        %v890 = vpack.c.bf16 %v882, %v880
        %v891 = vpack.c.bf16 %v675, %v675
        %v892 = vpack.c.bf16 %v688, %v688
        %vm893 = vcmask 261120
        %v895 = vsel %vm893, %v884, 0
        %v898 = vsel %vm893, %v886, 0
        %v901 = vsel %vm893, %v888, 0
        %v904 = vsel %vm893, %v890, 0
        %v907 = vsel %vm893, %v892, 0
        %909 = vmatpush.bf16.xpose.msra.mxu0 0
        %910 = vmatpush.bf16.xpose.msra.mxu0 0
        %911 = vmatpush.bf16.xpose.msra.mxu0 0
        %912 = vmatpush.bf16.xpose.msra.mxu0 0
        %913 = vmatpush.bf16.xpose.msra.mxu0 0
        %914 = vmatpush.bf16.xpose.msra.mxu0 0
        %915 = vmatpush.bf16.xpose.msra.mxu0 0
        %916 = vmatpush.bf16.xpose.msra.mxu0 %v891
        %917 = vmatmul.bf16.gmra.mxu0 %v883
        %v918 = vpop.f32.mrf.mxu0
        %v919 = vadd.f32 0.0, %v918
        %v920 = vpop.f32.mrf.mxu0
        %v921 = vadd.f32 0.0, %v920
        %922 = vmatmul.bf16.gmra.mxu0 %v885
        %v923 = vpop.f32.mrf.mxu0
        %v924 = vadd.f32 0.0, %v923
        %v925 = vpop.f32.mrf.mxu0
        %v926 = vadd.f32 0.0, %v925
        %927 = vmatmul.bf16.gmra.mxu0 %v887
        %v928 = vpop.f32.mrf.mxu0
        %v929 = vadd.f32 0.0, %v928
        %v930 = vpop.f32.mrf.mxu0
        %v931 = vadd.f32 0.0, %v930
        %932 = vmatmul.bf16.gmra.mxu0 %v889
        %v933 = vpop.f32.mrf.mxu0
        %v934 = vadd.f32 0.0, %v933
        %v935 = vpop.f32.mrf.mxu0
        %v936 = vadd.f32 0.0, %v935
        %937 = vdwg.mxu0
        %938 = vmatpush.bf16.xpose.msra.mxu0 0
        %939 = vmatpush.bf16.xpose.msra.mxu0 0
        %940 = vmatpush.bf16.xpose.msra.mxu0 0
        %941 = vmatpush.bf16.xpose.msra.mxu0 0
        %942 = vmatpush.bf16.xpose.msra.mxu0 0
        %943 = vmatpush.bf16.xpose.msra.mxu0 0
        %944 = vmatpush.bf16.xpose.msra.mxu0 0
        %945 = vmatpush.bf16.xpose.msra.mxu0 %v907
        %946 = vmatmul.bf16.gmra.mxu0 %v895
        %v947 = vpop.f32.mrf.mxu0
        %v948 = vadd.f32 %v919, %v947
        %v949 = vpop.f32.mrf.mxu0
        %v950 = vadd.f32 %v921, %v949
        %951 = vmatmul.bf16.gmra.mxu0 %v898
        %v952 = vpop.f32.mrf.mxu0
        %v953 = vadd.f32 %v924, %v952
        %v954 = vpop.f32.mrf.mxu0
        %v955 = vadd.f32 %v926, %v954
        %956 = vmatmul.bf16.gmra.mxu0 %v901
        %v957 = vpop.f32.mrf.mxu0
        %v958 = vadd.f32 %v929, %v957
        %v959 = vpop.f32.mrf.mxu0
        %v960 = vadd.f32 %v931, %v959
        %961 = vmatmul.bf16.gmra.mxu0 %v904
        %v962 = vpop.f32.mrf.mxu0
        %v963 = vadd.f32 %v934, %v962
        %v964 = vpop.f32.mrf.mxu0
        %v965 = vadd.f32 %v936, %v964
        %966 = vdwg.mxu0
        %vm967 = vcmask 64512
        %v968 = vsel %vm967, %v948, -inf
        %969 = vmax.xlane.f32.xlu0 %v968
        %v970 = vpop.xlane.xlu0 %969
        %v971 = vsel %vm967, %v950, -inf
        %972 = vmax.xlane.f32.xlu0 %v971
        %v973 = vpop.xlane.xlu0 %972
        %v974 = vsel %vm967, %v953, -inf
        %975 = vmax.xlane.f32.xlu0 %v974
        %v976 = vpop.xlane.xlu0 %975
        %v977 = vsel %vm967, %v955, -inf
        %978 = vmax.xlane.f32.xlu0 %v977
        %v979 = vpop.xlane.xlu0 %978
        %v980 = vsel %vm967, %v958, -inf
        %981 = vmax.xlane.f32.xlu0 %v980
        %v982 = vpop.xlane.xlu0 %981
        %v983 = vsel %vm967, %v960, -inf
        %984 = vmax.xlane.f32.xlu0 %v983
        %v985 = vpop.xlane.xlu0 %984
        %v986 = vsel %vm967, %v963, -inf
        %987 = vmax.xlane.f32.xlu0 %v986
        %v988 = vpop.xlane.xlu0 %987
        %v989 = vsel %vm967, %v965, -inf
        %990 = vmax.xlane.f32.xlu0 %v989
        %v991 = vpop.xlane.xlu0 %990
        %v992 = vsub.f32 %v948, %v970
        %v993 = vsub.f32 %v950, %v973
        %v994 = vsub.f32 %v953, %v976
        %v995 = vsub.f32 %v955, %v979
        %v996 = vsub.f32 %v958, %v982
        %v997 = vsub.f32 %v960, %v985
        %v998 = vsub.f32 %v963, %v988
        %v999 = vsub.f32 %v965, %v991
        %v1000 = vmul.f32 %v992, 1.442695
        %v1001 = vpow.pop %v1000
        %v1002 = vmul.f32 %v993, 1.442695
        %v1003 = vpow.pop %v1002
        %v1004 = vmul.f32 %v994, 1.442695
        %v1005 = vpow.pop %v1004
        %v1006 = vmul.f32 %v995, 1.442695
        %v1007 = vpow.pop %v1006
        %v1008 = vmul.f32 %v996, 1.442695
        %v1009 = vpow.pop %v1008
        %v1010 = vmul.f32 %v997, 1.442695
        %v1011 = vpow.pop %v1010
        %v1012 = vmul.f32 %v998, 1.442695
        %v1013 = vpow.pop %v1012
        %v1014 = vmul.f32 %v999, 1.442695
        %v1015 = vpow.pop %v1014
        %v1016 = vsel %vm967, %v1001, 0.0
        %1017 = vadd.xlane.f32.xlu0 %v1016
        %v1018 = vpop.xlane.xlu0 %1017
        %v1019 = vsel %vm967, %v1003, 0.0
        %1020 = vadd.xlane.f32.xlu0 %v1019
        %v1021 = vpop.xlane.xlu0 %1020
        %v1022 = vsel %vm967, %v1005, 0.0
        %1023 = vadd.xlane.f32.xlu0 %v1022
        %v1024 = vpop.xlane.xlu0 %1023
        %v1025 = vsel %vm967, %v1007, 0.0
        %1026 = vadd.xlane.f32.xlu0 %v1025
        %v1027 = vpop.xlane.xlu0 %1026
        %v1028 = vsel %vm967, %v1009, 0.0
        %1029 = vadd.xlane.f32.xlu0 %v1028
        %v1030 = vpop.xlane.xlu0 %1029
        %v1031 = vsel %vm967, %v1011, 0.0
        %1032 = vadd.xlane.f32.xlu0 %v1031
        %v1033 = vpop.xlane.xlu0 %1032
        %v1034 = vsel %vm967, %v1013, 0.0
        %1035 = vadd.xlane.f32.xlu0 %v1034
        %v1036 = vpop.xlane.xlu0 %1035
        %v1037 = vsel %vm967, %v1015, 0.0
        %1038 = vadd.xlane.f32.xlu0 %v1037
        %v1039 = vpop.xlane.xlu0 %1038
        %v1040 = vrcp.pop %v1018
        %v1041 = vrcp.pop %v1021
        %v1042 = vrcp.pop %v1024
        %v1043 = vrcp.pop %v1027
        %v1044 = vrcp.pop %v1030
        %v1045 = vrcp.pop %v1033
        %v1046 = vrcp.pop %v1036
        %v1047 = vrcp.pop %v1039
        %v1048 = vmul.f32 %v1001, %v1040
        %v1049 = vmul.f32 %v1003, %v1041
        %v1050 = vmul.f32 %v1005, %v1042
        %v1051 = vmul.f32 %v1007, %v1043
        %v1052 = vmul.f32 %v1009, %v1044
        %v1053 = vmul.f32 %v1011, %v1045
        %v1054 = vmul.f32 %v1013, %v1046
        %v1055 = vmul.f32 %v1015, %v1047
        %v1056 = vpack.c.bf16 %v1049, %v1048
        %v1057 = vpack.c.bf16 %v1051, %v1050
        %v1058 = vpack.c.bf16 %v1053, %v1052
        %v1059 = vpack.c.bf16 %v1055, %v1054
        %v1060 = vpack.c.bf16 %v793, %v793
        %v1061 = vpack.c.bf16 %v806, %v806
        %v1063 = vsel %vm967, %v1056, 0
        %v1066 = vsel %vm967, %v1057, 0
        %v1069 = vsel %vm967, %v1058, 0
        %v1072 = vsel %vm967, %v1059, 0
        %vm1074 = vcmask 1043456
        %v1076 = vsel %vm1074, %v1060, 0
        %v1079 = vsel %vm1074, %v1061, 0
        %1081 = vmatpush.bf16.msra.mxu0 0
        %1082 = vmatpush.bf16.msra.mxu0 0
        %1083 = vmatpush.bf16.msra.mxu0 0
        %1084 = vmatpush.bf16.msra.mxu0 0
        %1085 = vmatpush.bf16.msra.mxu0 0
        %1086 = vmatpush.bf16.msra.mxu0 0
        %1087 = vmatpush.bf16.msra.mxu0 0
        %1088 = vmatpush.bf16.msra.mxu0 %v1076
        %1089 = vmatmul.bf16.gmra.mxu0 %v1063
        %v1090 = vpop.f32.mrf.mxu0
        %v1091 = vadd.f32 0.0, %v1090
        %v1092 = vpop.f32.mrf.mxu0
        %v1093 = vadd.f32 0.0, %v1092
        %1094 = vmatmul.bf16.gmra.mxu0 %v1066
        %v1095 = vpop.f32.mrf.mxu0
        %v1096 = vadd.f32 0.0, %v1095
        %v1097 = vpop.f32.mrf.mxu0
        %v1098 = vadd.f32 0.0, %v1097
        %1099 = vmatmul.bf16.gmra.mxu0 %v1069
        %v1100 = vpop.f32.mrf.mxu0
        %v1101 = vadd.f32 0.0, %v1100
        %v1102 = vpop.f32.mrf.mxu0
        %v1103 = vadd.f32 0.0, %v1102
        %1104 = vmatmul.bf16.gmra.mxu0 %v1072
        %v1105 = vpop.f32.mrf.mxu0
        %v1106 = vadd.f32 0.0, %v1105
        %v1107 = vpop.f32.mrf.mxu0
        %v1108 = vadd.f32 0.0, %v1107
        %1109 = vdwg.mxu0
        %1110 = vmatpush.bf16.msra.mxu0 0
        %1111 = vmatpush.bf16.msra.mxu0 0
        %1112 = vmatpush.bf16.msra.mxu0 0
        %1113 = vmatpush.bf16.msra.mxu0 0
        %1114 = vmatpush.bf16.msra.mxu0 0
        %1115 = vmatpush.bf16.msra.mxu0 0
        %1116 = vmatpush.bf16.msra.mxu0 0
        %1117 = vmatpush.bf16.msra.mxu0 %v1079
        %1118 = vmatmul.bf16.gmra.mxu0 %v1063
        %v1119 = vpop.f32.mrf.mxu0
        %v1120 = vadd.f32 0.0, %v1119
        %v1121 = vpop.f32.mrf.mxu0
        %v1122 = vadd.f32 0.0, %v1121
        %1123 = vmatmul.bf16.gmra.mxu0 %v1066
        %v1124 = vpop.f32.mrf.mxu0
        %v1125 = vadd.f32 0.0, %v1124
        %v1126 = vpop.f32.mrf.mxu0
        %v1127 = vadd.f32 0.0, %v1126
        %1128 = vmatmul.bf16.gmra.mxu0 %v1069
        %v1129 = vpop.f32.mrf.mxu0
        %v1130 = vadd.f32 0.0, %v1129
        %v1131 = vpop.f32.mrf.mxu0
        %v1132 = vadd.f32 0.0, %v1131
        %1133 = vmatmul.bf16.gmra.mxu0 %v1072
        %v1134 = vpop.f32.mrf.mxu0
        %v1135 = vadd.f32 0.0, %v1134
        %v1136 = vpop.f32.mrf.mxu0
        %v1137 = vadd.f32 0.0, %v1136
        %1138 = vdwg.mxu0
        %v1139 = vmul.f32 %v1091, %v614
        %v1140 = vmul.f32 %v1120, %v615
        %v1141 = vmul.f32 %v1093, %v614
        %v1142 = vmul.f32 %v1122, %v615
        %v1143 = vmul.f32 %v1096, %v614
        %v1144 = vmul.f32 %v1125, %v615
        %v1145 = vmul.f32 %v1098, %v614
        %v1146 = vmul.f32 %v1127, %v615
        %v1147 = vmul.f32 %v1101, %v614
        %v1148 = vmul.f32 %v1130, %v615
        %v1149 = vmul.f32 %v1103, %v614
        %v1150 = vmul.f32 %v1132, %v615
        %v1151 = vmul.f32 %v1106, %v614
        %v1152 = vmul.f32 %v1135, %v615
        %v1153 = vmul.f32 %v1108, %v614
        %v1154 = vmul.f32 %v1137, %v615
        %v1155 = vrot.slane %v1139, 4
        %v1156 = vadd.f32 %v1139, %v1155
        %v1157 = vrot.slane %v1156, 2
        %v1158 = vadd.f32 %v1156, %v1157
        %v1159 = vrot.slane %v1158, 1
        %v1160 = vadd.f32 %v1158, %v1159
        %v1161 = vsel %vm893, %v1140, 0.0
        %v1162 = vrot.slane %v1161, 4
        %v1163 = vadd.f32 %v1161, %v1162
        %v1164 = vrot.slane %v1163, 2
        %v1165 = vadd.f32 %v1163, %v1164
        %v1166 = vrot.slane %v1165, 1
        %v1167 = vadd.f32 %v1165, %v1166
        %v1168 = vrot.slane %v1141, 4
        %v1169 = vadd.f32 %v1141, %v1168
        %v1170 = vrot.slane %v1169, 2
        %v1171 = vadd.f32 %v1169, %v1170
        %v1172 = vrot.slane %v1171, 1
        %v1173 = vadd.f32 %v1171, %v1172
        %v1174 = vsel %vm893, %v1142, 0.0
        %v1175 = vrot.slane %v1174, 4
        %v1176 = vadd.f32 %v1174, %v1175
        %v1177 = vrot.slane %v1176, 2
        %v1178 = vadd.f32 %v1176, %v1177
        %v1179 = vrot.slane %v1178, 1
        %v1180 = vadd.f32 %v1178, %v1179
        %v1181 = vrot.slane %v1143, 4
        %v1182 = vadd.f32 %v1143, %v1181
        %v1183 = vrot.slane %v1182, 2
        %v1184 = vadd.f32 %v1182, %v1183
        %v1185 = vrot.slane %v1184, 1
        %v1186 = vadd.f32 %v1184, %v1185
        %v1187 = vsel %vm893, %v1144, 0.0
        %v1188 = vrot.slane %v1187, 4
        %v1189 = vadd.f32 %v1187, %v1188
        %v1190 = vrot.slane %v1189, 2
        %v1191 = vadd.f32 %v1189, %v1190
        %v1192 = vrot.slane %v1191, 1
        %v1193 = vadd.f32 %v1191, %v1192
        %v1194 = vrot.slane %v1145, 4
        %v1195 = vadd.f32 %v1145, %v1194
        %v1196 = vrot.slane %v1195, 2
        %v1197 = vadd.f32 %v1195, %v1196
        %v1198 = vrot.slane %v1197, 1
        %v1199 = vadd.f32 %v1197, %v1198
        %v1200 = vsel %vm893, %v1146, 0.0
        %v1201 = vrot.slane %v1200, 4
        %v1202 = vadd.f32 %v1200, %v1201
        %v1203 = vrot.slane %v1202, 2
        %v1204 = vadd.f32 %v1202, %v1203
        %v1205 = vrot.slane %v1204, 1
        %v1206 = vadd.f32 %v1204, %v1205
        %v1207 = vrot.slane %v1147, 4
        %v1208 = vadd.f32 %v1147, %v1207
        %v1209 = vrot.slane %v1208, 2
        %v1210 = vadd.f32 %v1208, %v1209
        %v1211 = vrot.slane %v1210, 1
        %v1212 = vadd.f32 %v1210, %v1211
        %v1213 = vsel %vm893, %v1148, 0.0
        %v1214 = vrot.slane %v1213, 4
        %v1215 = vadd.f32 %v1213, %v1214
        %v1216 = vrot.slane %v1215, 2
        %v1217 = vadd.f32 %v1215, %v1216
        %v1218 = vrot.slane %v1217, 1
        %v1219 = vadd.f32 %v1217, %v1218
        %v1220 = vrot.slane %v1149, 4
        %v1221 = vadd.f32 %v1149, %v1220
        %v1222 = vrot.slane %v1221, 2
        %v1223 = vadd.f32 %v1221, %v1222
        %v1224 = vrot.slane %v1223, 1
        %v1225 = vadd.f32 %v1223, %v1224
        %v1226 = vsel %vm893, %v1150, 0.0
        %v1227 = vrot.slane %v1226, 4
        %v1228 = vadd.f32 %v1226, %v1227
        %v1229 = vrot.slane %v1228, 2
        %v1230 = vadd.f32 %v1228, %v1229
        %v1231 = vrot.slane %v1230, 1
        %v1232 = vadd.f32 %v1230, %v1231
        %v1233 = vrot.slane %v1151, 4
        %v1234 = vadd.f32 %v1151, %v1233
        %v1235 = vrot.slane %v1234, 2
        %v1236 = vadd.f32 %v1234, %v1235
        %v1237 = vrot.slane %v1236, 1
        %v1238 = vadd.f32 %v1236, %v1237
        %v1239 = vsel %vm893, %v1152, 0.0
        %v1240 = vrot.slane %v1239, 4
        %v1241 = vadd.f32 %v1239, %v1240
        %v1242 = vrot.slane %v1241, 2
        %v1243 = vadd.f32 %v1241, %v1242
        %v1244 = vrot.slane %v1243, 1
        %v1245 = vadd.f32 %v1243, %v1244
        %v1246 = vrot.slane %v1153, 4
        %v1247 = vadd.f32 %v1153, %v1246
        %v1248 = vrot.slane %v1247, 2
        %v1249 = vadd.f32 %v1247, %v1248
        %v1250 = vrot.slane %v1249, 1
        %v1251 = vadd.f32 %v1249, %v1250
        %v1252 = vsel %vm893, %v1154, 0.0
        %v1253 = vrot.slane %v1252, 4
        %v1254 = vadd.f32 %v1252, %v1253
        %v1255 = vrot.slane %v1254, 2
        %v1256 = vadd.f32 %v1254, %v1255
        %v1257 = vrot.slane %v1256, 1
        %v1258 = vadd.f32 %v1256, %v1257
        %s1259 = smul.u32 %s618, 20
        %s1260 = smul.addr %s1259, 4
        %s1261 = scalar_lea.vmem %s7, %s1260
        %v1262 = vld [vmem:[%s1261] sm:$0xf]
        %v1263 = vld [vmem:[%s1261 + $0x4] sm:$0xf]
        %v1264 = vld [vmem:[%s1261 + $0x8] sm:$0xf]
        %v1265 = vld [vmem:[%s1261 + $0xc] sm:$0xf]
        %v1266 = vld [vmem:[%s1261 + $0x10] sm:$0xf]
        %v1267 = vld [vmem:[%s1261 + $0x14] sm:$0xf]
        %v1268 = vld [vmem:[%s1261 + $0x18] sm:$0xf]
        %v1269 = vld [vmem:[%s1261 + $0x1c] sm:$0xf]
        %v1270 = vld [vmem:[%s1261 + $0x20] sm:$0xf]
        %v1271 = vld [vmem:[%s1261 + $0x24] sm:$0xf]
        %v1272 = vld [vmem:[%s1261 + $0x28] sm:$0xf]
        %v1273 = vld [vmem:[%s1261 + $0x2c] sm:$0xf]
        %v1274 = vld [vmem:[%s1261 + $0x30] sm:$0xf]
        %v1275 = vld [vmem:[%s1261 + $0x34] sm:$0xf]
        %v1276 = vld [vmem:[%s1261 + $0x38] sm:$0xf]
        %v1277 = vld [vmem:[%s1261 + $0x3c] sm:$0xf]
        %v1278 = vld [vmem:[%s1261 + $0x40] sm:$0xf]
        %v1279 = vld [vmem:[%s1261 + $0x44] sm:$0xf]
        %v1280 = vld [vmem:[%s1261 + $0x48] sm:$0xf]
        %v1281 = vld [vmem:[%s1261 + $0x4c] sm:$0xf]
        %v1282 = vpack.c.bf16 %v1160, %v1160
        %v1283 = vpack.c.bf16 %v1167, %v1167
        %v1284 = vpack.c.bf16 %v1173, %v1173
        %v1285 = vpack.c.bf16 %v1180, %v1180
        %v1286 = vpack.c.bf16 %v1186, %v1186
        %v1287 = vpack.c.bf16 %v1193, %v1193
        %v1288 = vpack.c.bf16 %v1199, %v1199
        %v1289 = vpack.c.bf16 %v1206, %v1206
        %v1290 = vpack.c.bf16 %v1212, %v1212
        %v1291 = vpack.c.bf16 %v1219, %v1219
        %v1292 = vpack.c.bf16 %v1225, %v1225
        %v1293 = vpack.c.bf16 %v1232, %v1232
        %v1294 = vpack.c.bf16 %v1238, %v1238
        %v1295 = vpack.c.bf16 %v1245, %v1245
        %v1296 = vpack.c.bf16 %v1251, %v1251
        %v1297 = vpack.c.bf16 %v1258, %v1258
        %s1298 = scalar_lea.vmem %s8, %s618
        %v1299 = vld [vmem:[%s1298] sm:$0x1]
        %v1301 = vperm.slane %v1299, 0
        %v1319 = vunpack.c.l.b16 %v1282
        %v1320 = vunpack.c.l.b16 %v1283
        %v1321 = vunpack.c.l.b16 %v1284
        %v1322 = vunpack.c.l.b16 %v1285
        %v1323 = vunpack.c.l.b16 %v1286
        %v1324 = vunpack.c.l.b16 %v1287
        %v1325 = vunpack.c.l.b16 %v1288
        %v1326 = vunpack.c.l.b16 %v1289
        %v1327 = vunpack.c.l.b16 %v1290
        %v1328 = vunpack.c.l.b16 %v1291
        %v1329 = vunpack.c.l.b16 %v1292
        %v1330 = vunpack.c.l.b16 %v1293
        %v1331 = vunpack.c.l.b16 %v1294
        %v1332 = vunpack.c.l.b16 %v1295
        %v1333 = vunpack.c.l.b16 %v1296
        %v1334 = vunpack.c.l.b16 %v1297
        %v1335 = vsel %vm814, %v1321, %v1319
        %v1336 = vsel %vm817, %v1323, %v1335
        %v1337 = vsel %vm820, %v1325, %v1336
        %v1338 = vsel %vm823, %v1327, %v1337
        %v1339 = vsel %vm826, %v1329, %v1338
        %v1340 = vsel %vm829, %v1331, %v1339
        %vm1341 = vcmask 1047559
        %v1342 = vsel %vm1341, %v1333, %v1340
        %v1343 = vsel %vm814, %v1322, %v1320
        %v1344 = vsel %vm817, %v1324, %v1343
        %v1345 = vsel %vm820, %v1326, %v1344
        %v1346 = vsel %vm823, %v1328, %v1345
        %v1347 = vsel %vm826, %v1330, %v1346
        %v1348 = vsel %vm829, %v1332, %v1347
        %v1349 = vsel %vm1341, %v1334, %v1348
        %v1350 = vpack.c.b16 %v1342, %v1342
        %v1351 = vpack.c.b16 %v1349, %v1349
        %v1373 = vunpack.c.l.b16 %v1262
        %v1374 = vunpack.c.l.b16 %v1263
        %v1375 = vunpack.c.l.b16 %v1264
        %v1376 = vunpack.c.l.b16 %v1265
        %v1377 = vunpack.c.l.b16 %v1266
        %v1378 = vunpack.c.l.b16 %v1267
        %v1379 = vunpack.c.l.b16 %v1268
        %v1380 = vunpack.c.l.b16 %v1269
        %v1381 = vunpack.c.l.b16 %v1270
        %v1382 = vunpack.c.l.b16 %v1271
        %v1383 = vunpack.c.l.b16 %v1272
        %v1384 = vunpack.c.l.b16 %v1273
        %v1385 = vunpack.c.l.b16 %v1274
        %v1386 = vunpack.c.l.b16 %v1275
        %v1387 = vunpack.c.l.b16 %v1276
        %v1388 = vunpack.c.l.b16 %v1277
        %v1389 = vunpack.c.l.b16 %v1278
        %v1390 = vunpack.c.l.b16 %v1279
        %v1391 = vunpack.c.l.b16 %v1280
        %v1392 = vunpack.c.l.b16 %v1281
        %v1393 = vpack.c.b16 %v1374, %v1373
        %v1394 = vpack.c.b16 %v1376, %v1375
        %v1395 = vpack.c.b16 %v1378, %v1377
        %v1396 = vpack.c.b16 %v1380, %v1379
        %v1397 = vpack.c.b16 %v1382, %v1381
        %v1398 = vpack.c.b16 %v1384, %v1383
        %v1399 = vpack.c.b16 %v1386, %v1385
        %v1400 = vpack.c.b16 %v1388, %v1387
        %v1401 = vpack.c.b16 %v1390, %v1389
        %v1402 = vpack.c.b16 %v1392, %v1391
        %v1414 = vsel %vm893, %v1351, 0
        %1416 = vmatpush.bf16.msra.mxu0 %v1400
        %1417 = vmatpush.bf16.msra.mxu0 %v1399
        %1418 = vmatpush.bf16.msra.mxu0 %v1398
        %1419 = vmatpush.bf16.msra.mxu0 %v1397
        %1420 = vmatpush.bf16.msra.mxu0 %v1396
        %1421 = vmatpush.bf16.msra.mxu0 %v1395
        %1422 = vmatpush.bf16.msra.mxu0 %v1394
        %1423 = vmatpush.bf16.msra.mxu0 %v1393
        %1424 = vmatmul.bf16.gmra.mxu0 %v1350
        %v1425 = vpop.f32.mrf.mxu0
        %v1426 = vadd.f32 %v1301, %v1425
        %v1427 = vpop.f32.mrf.mxu0
        %1428 = vdwg.mxu0
        %1429 = vmatpush.bf16.msra.mxu0 0
        %1430 = vmatpush.bf16.msra.mxu0 0
        %1431 = vmatpush.bf16.msra.mxu0 0
        %1432 = vmatpush.bf16.msra.mxu0 0
        %1433 = vmatpush.bf16.msra.mxu0 0
        %1434 = vmatpush.bf16.msra.mxu0 0
        %1435 = vmatpush.bf16.msra.mxu0 %v1402
        %1436 = vmatpush.bf16.msra.mxu0 %v1401
        %1437 = vmatmul.bf16.gmra.mxu0 %v1414
        %v1438 = vpop.f32.mrf.mxu0
        %v1439 = vadd.f32 %v1426, %v1438
        %v1440 = vpop.f32.mrf.mxu0
        %1441 = vdwg.mxu0
        %v1442 = vadd.f32 %v1439, %v623
        %s1443 = scalar_lea.vmem %s9, %s618
        %v1444 = vld [vmem:[%s1443] sm:$0x1]
        %s1445 = scalar_lea.vmem %s10, %s618
        %v1446 = vld [vmem:[%s1445] sm:$0x1]
        %v1447 = vsel %vm654, %v1442, 0.0
        %1448 = vadd.xlane.f32.xlu0 %v1447
        %v1449 = vpop.xlane.xlu0 %1448
        %v1450 = vrcp.pop 20.0
        %v1451 = vmul.f32 20.0, %v1450
        %v1452 = vsub.f32 1.0, %v1451
        %v1453 = vmul.f32 %v1450, %v1452
        %v1454 = vadd.f32 %v1450, %v1453
        %vm1455 = vweird.f32 %v1450
        %v1456 = vsel %vm1455, %v1450, %v1454
        %v1457 = vmul.f32 %v1449, %v1456
        %v1458 = vsub.f32 %v1442, %v1457
        %v1459 = vmul.f32 %v1458, %v1458
        %v1460 = vsel %vm654, %v1459, 0.0
        %1461 = vadd.xlane.f32.xlu0 %v1460
        %v1462 = vpop.xlane.xlu0 %1461
        %v1463 = vmul.f32 %v1462, %v1456
        %v1464 = vadd.f32 %v1463, 1e-05
        %v1465 = vrsqrt.pop %v1464
        %v1466 = vmul.f32 %v1465, %v1464
        %v1467 = vmul.f32 %v1466, %v1465
        %v1468 = vmul.f32 0.5, %v1467
        %v1469 = vsub.f32 1.5, %v1468
        %v1470 = vmul.f32 %v1465, %v1469
        %vm1471 = vweird.f32 %v1464
        %vm1472 = vweird.f32 %v1465
        %vm1473 = vmor %vm1471, %vm1472
        %v1474 = vsel %vm1473, %v1465, %v1470
        %v1475 = vmul.f32 %v1458, %v1474
        %v1477 = vperm.slane %v1444, 0
        %v1479 = vmul.f32 %v1475, %v1477
        %v1481 = vperm.slane %v1446, 0
        %v1483 = vadd.f32 %v1479, %v1481
        %s1484 = smul.u32 %s618, 3
        %s1485 = smul.addr %s1484, 4
        %s1486 = scalar_lea.vmem %s11, %s1485
        %v1487 = vld [vmem:[%s1486] sm:$0xf]
        %v1488 = vld [vmem:[%s1486 + $0x4] sm:$0xf]
        %v1489 = vld [vmem:[%s1486 + $0x8] sm:$0x3]
        %v1490 = vpack.c.bf16 %v1483, %v1483
        %s1491 = scalar_lea.vmem %s12, %s618
        %v1492 = vld [vmem:[%s1491] sm:$0x1]
        %v1494 = vperm.slane %v1492, 0
        %v1499 = vunpack.c.l.b16 %v1487
        %v1500 = vunpack.c.l.b16 %v1488
        %v1501 = vunpack.c.l.b16 %v1489
        %v1502 = vpack.c.b16 %v1500, %v1499
        %v1503 = vpack.c.b16 %v1501, %v1501
        %v1506 = vsel %vm654, %v1490, 0
        %v1509 = vsel %vm658, %v1503, 0
        %1511 = vmatpush.bf16.msra.mxu0 0
        %1512 = vmatpush.bf16.msra.mxu0 0
        %1513 = vmatpush.bf16.msra.mxu0 0
        %1514 = vmatpush.bf16.msra.mxu0 0
        %1515 = vmatpush.bf16.msra.mxu0 0
        %1516 = vmatpush.bf16.msra.mxu0 0
        %1517 = vmatpush.bf16.msra.mxu0 %v1509
        %1518 = vmatpush.bf16.msra.mxu0 %v1502
        %1519 = vmatmul.bf16.gmra.mxu0 %v1506
        %v1520 = vpop.f32.mrf.mxu0
        %v1521 = vadd.f32 %v1494, %v1520
        %v1522 = vpop.f32.mrf.mxu0
        %1523 = vdwg.mxu0
        %v1524 = vmax.f32 %v1521, 0.0
        %s1525 = smul.u32 %s618, 10
        %s1526 = smul.addr %s1525, 4
        %s1527 = scalar_lea.vmem %s13, %s1526
        %v1528 = vld [vmem:[%s1527] sm:$0xf]
        %v1529 = vld [vmem:[%s1527 + $0x4] sm:$0xf]
        %v1530 = vld [vmem:[%s1527 + $0x8] sm:$0xf]
        %v1531 = vld [vmem:[%s1527 + $0xc] sm:$0xf]
        %v1532 = vld [vmem:[%s1527 + $0x10] sm:$0xf]
        %v1533 = vld [vmem:[%s1527 + $0x14] sm:$0xf]
        %v1534 = vld [vmem:[%s1527 + $0x18] sm:$0xf]
        %v1535 = vld [vmem:[%s1527 + $0x1c] sm:$0xf]
        %v1536 = vld [vmem:[%s1527 + $0x20] sm:$0xf]
        %v1537 = vld [vmem:[%s1527 + $0x24] sm:$0xf]
        %v1538 = vpack.c.bf16 %v1524, %v1524
        %s1539 = scalar_lea.vmem %s14, %s618
        %v1540 = vld [vmem:[%s1539] sm:$0x1]
        %v1542 = vperm.slane %v1540, 0
        %v1554 = vunpack.c.l.b16 %v1528
        %v1555 = vunpack.c.l.b16 %v1529
        %v1556 = vunpack.c.l.b16 %v1530
        %v1557 = vunpack.c.l.b16 %v1531
        %v1558 = vunpack.c.l.b16 %v1532
        %v1559 = vunpack.c.l.b16 %v1533
        %v1560 = vunpack.c.l.b16 %v1534
        %v1561 = vunpack.c.l.b16 %v1535
        %v1562 = vunpack.c.l.b16 %v1536
        %v1563 = vunpack.c.l.b16 %v1537
        %v1564 = vpack.c.b16 %v1555, %v1554
        %v1565 = vpack.c.b16 %v1557, %v1556
        %v1566 = vpack.c.b16 %v1559, %v1558
        %v1567 = vpack.c.b16 %v1561, %v1560
        %v1568 = vpack.c.b16 %v1563, %v1562
        %vm1574 = vcmask 654336
        %v1576 = vsel %vm1574, %v1538, 0
        %1578 = vmatpush.bf16.msra.mxu0 0
        %1579 = vmatpush.bf16.msra.mxu0 0
        %1580 = vmatpush.bf16.msra.mxu0 0
        %1581 = vmatpush.bf16.msra.mxu0 %v1568
        %1582 = vmatpush.bf16.msra.mxu0 %v1567
        %1583 = vmatpush.bf16.msra.mxu0 %v1566
        %1584 = vmatpush.bf16.msra.mxu0 %v1565
        %1585 = vmatpush.bf16.msra.mxu0 %v1564
        %1586 = vmatmul.bf16.gmra.mxu0 %v1576
        %v1587 = vpop.f32.mrf.mxu0
        %v1588 = vadd.f32 %v1542, %v1587
        %v1589 = vpop.f32.mrf.mxu0
        %1590 = vdwg.mxu0
        %v1591 = vadd.f32 %v1588, %v1483
        %s1592 = scalar_lea.vmem %s15, %s618
        %v1593 = vld [vmem:[%s1592] sm:$0x1]
        %s1594 = scalar_lea.vmem %s16, %s618
        %v1595 = vld [vmem:[%s1594] sm:$0x1]
        %v1596 = vsel %vm654, %v1591, 0.0
        %1597 = vadd.xlane.f32.xlu0 %v1596
        %v1598 = vpop.xlane.xlu0 %1597
        %v1599 = vmul.f32 %v1598, %v1456
        %v1600 = vsub.f32 %v1591, %v1599
        %v1601 = vmul.f32 %v1600, %v1600
        %v1602 = vsel %vm654, %v1601, 0.0
        %1603 = vadd.xlane.f32.xlu0 %v1602
        %v1604 = vpop.xlane.xlu0 %1603
        %v1605 = vmul.f32 %v1604, %v1456
        %v1606 = vadd.f32 %v1605, 1e-05
        %v1607 = vrsqrt.pop %v1606
        %v1608 = vmul.f32 %v1607, %v1606
        %v1609 = vmul.f32 %v1608, %v1607
        %v1610 = vmul.f32 0.5, %v1609
        %v1611 = vsub.f32 1.5, %v1610
        %v1612 = vmul.f32 %v1607, %v1611
        %vm1613 = vweird.f32 %v1606
        %vm1614 = vweird.f32 %v1607
        %vm1615 = vmor %vm1613, %vm1614
        %v1616 = vsel %vm1615, %v1607, %v1612
        %v1617 = vmul.f32 %v1600, %v1616
        %v1619 = vperm.slane %v1593, 0
        %v1621 = vmul.f32 %v1617, %v1619
        %v1623 = vperm.slane %v1595, 0
        %v1625 = vadd.f32 %v1621, %v1623
      $region101: #{tpu_custom_call.1} parent=95 // loop_footer
        %s622 = sadd.s32 1, %s618
      $region102: #{tpu_custom_call.1} parent=95 // loop_footer_branch
        %617 = sbr.rel target = $region98
      $region103: #{tpu_custom_call.1} parent=95 // loop_exit
        _
      %v1626 = vld [vmem:[%s17] sm:$0x1]
      %v1628 = vperm.slane %v1626, 0
      %v1630 = vmul.f32 %v623, %v1628
      %vm1631 = vcmask 162816
      %v1632 = vsel %vm1631, %v1630, 0.0
      %1633 = vadd.xlane.f32.xlu0 %v1632
      %v1634 = vpop.xlane.xlu0 %1633
      %v1635 = vld [vmem:[#allocation2] sm:$0x1]
      %v1637 = vperm.slane %v1635, 0
      %v1639 = vadd.f32 %v1634, %v1637
      %vm1640 = vcmask 7168
      %v1641 = vsel %vm1640, %v1639, 0.0
      %v1642 = vrot.slane %v1641, 4
      %v1643 = vadd.f32 %v1641, %v1642
      %v1644 = vrot.slane %v1643, 2
      %v1645 = vadd.f32 %v1643, %v1644
      %v1646 = vrot.slane %v1645, 1
      %v1647 = vadd.f32 %v1645, %v1646
      %v1648 = vmul.f32 %v1647, 0.125
      %v1649 = vsub.f32 0.0, %v1648
      %v1650 = vmul.f32 %v1649, 1.442695
      %v1651 = vpow.pop %v1650
      %v1652 = vadd.f32 %v1651, 1.0
      %v1653 = vrcp.pop %v1652
      %v1654 = vmul.f32 %v1652, %v1653
      %v1655 = vsub.f32 1.0, %v1654
      %v1656 = vmul.f32 %v1653, %v1655
      %v1657 = vadd.f32 %v1653, %v1656
      %vm1658 = vweird.f32 %v1652
      %vm1659 = vweird.f32 %v1653
      %vm1660 = vmor %vm1658, %vm1659
      %v1661 = vsel %vm1660, %v1653, %v1657
      %v1662 = vand.u32 2147483647, %v1652
      %vm1663 = vcmp.eq.f32.partialorder %v1662, 8.507059e+37
      %v1664 = vand.u32 %v1652, 2147483648
      %v1665 = vor.u32 1.1754944e-38, %v1664
      %v1666 = vsel %vm1663, %v1665, %v1661
      %v1667 = vmul.f32 1.0, %v1666
      %vm1668 = vcmask 0
      %1669 = vst.msk [vmem:[%s597] sm:$0x1] %vm1668, %v1667
      %p1670 = scmp.lt.s32.totalorder %s32, 1
      %s1671 = scalar_select %p1670, %s32, 1
      %s1672 = scalar_lea.vmem %s19, %s1671
      // Predicated region
      $region104: #{tpu_custom_call.1} parent=95 // pred_check
        %p1673 = pneg %p454
      $region105: #{tpu_custom_call.1} parent=95 // pred_check_branch
        %1675 = sbr.rel (%p1673) target = $region107
      $region106: #{tpu_custom_call.1} parent=95 // pred_region
        _
      $region107: #{tpu_custom_call.1} parent=95 // pred_fallthru
        _
    $region96: #{tpu_custom_call.1} parent=5 // pred_fallthru
      _
    %p1676 = scmp.le.s32.totalorder 2, %s27
    // Predicated region
    $region108: #{tpu_custom_call.1} parent=5 // pred_check
      %p1677 = pneg %p1676
    $region109: #{tpu_custom_call.1} parent=5 // pred_check_branch
      %1679 = sbr.rel (%p1677) target = $region111
    $region110: #{tpu_custom_call.1} parent=5 // pred_region
      %s1680 = ssub.s32 %s27, 2
      // Predicated region
      $region112: #{tpu_custom_call.1} parent=110 // pred_check
        %p1681 = pneg %p460
      $region113: #{tpu_custom_call.1} parent=110 // pred_check_branch
        %1683 = sbr.rel (%p1681) target = $region115
      $region114: #{tpu_custom_call.1} parent=110 // pred_region
        %p1684 = scmp.lt.s32.totalorder %s33, 1
        %s1685 = scalar_select %p1684, %s33, 1
        %s1686 = scalar_lea.vmem %s19, %s1685
      $region115: #{tpu_custom_call.1} parent=110 // pred_fallthru
        _
    $region111: #{tpu_custom_call.1} parent=5 // pred_fallthru
      _
  $region6: #{tpu_custom_call.1} parent=0 // loop_footer
    %s31 = sadd.s32 1, %s27
  $region7: #{tpu_custom_call.1} parent=0 // loop_footer_branch
    %26 = sbr.rel target = $region3
  $region8: #{tpu_custom_call.1} parent=0 // loop_exit
    _

</llo_original>
